<compile_context>
chip_gen: v7x
topology: tpu7x:2x2x1
jax: 0.10.0
libtpu: 0.0.40
codegen_flags: <defaults>
</compile_context>

<pallas_src>
import jax
import jax.numpy as jnp
from jax import lax
from jax.experimental import pallas as pl
from jax.experimental.pallas import tpu as pltpu


def _sentiment_kernel(x_ref, h0_ref, c0_ref, wih_ref, whh_ref, b_ref,
                      wfc_ref, bfc_ref,
                      out_ref, hn_ref, cn_ref,
                      xp_ref):
    """Wavefront multi-layer LSTM recurrence + last-step FC + sigmoid, VMEM-resident.

    Layouts (pre-arranged in the wrapper so the kernel never transposes):
      x_ref   : (S*B_pad, E) bf16  time-major flattened embeddings (row t*B_pad + b)
      wih_ref : (L, E, 4H)   bf16  pre-transposed, PyTorch gate order [i, f, g, o]
      whh_ref : (L, H, 4H)   bf16  pre-transposed
      b_ref   : (L, 1, 4H)   f32   pre-summed b_ih + b_hh
      wfc_ref : (H, 1)       f32   pre-transposed, sliced to the consumed column
      bfc_ref : (1, 1)       f32
    """
    SB, _ = x_ref.shape
    L, _, fourH = b_ref.shape
    H = fourH // 4
    Bp = h0_ref.shape[1]                 # padded batch, multiple of 8 (sublane tile)
    S = SB // Bp

    # Hoist per-layer weight/bias loads out of the time loop (tiny, vreg-resident).
    w_ih = [wih_ref[l] for l in range(L)]        # (E, 4H) bf16
    w_hh = [whh_ref[l] for l in range(L)]        # (H, 4H) bf16
    bias = [b_ref[l] for l in range(L)]          # (1, 4H) f32

    # Layer-0 input projection hoisted out of the recurrence: one big MXU matmul over
    # the whole padded sequence, bias folded in once.  bf16 inputs, f32 accumulation.
    xp_ref[...] = (jnp.dot(x_ref[...], w_ih[0],
                           preferred_element_type=jnp.float32) + bias[0])

    def lstm_cell(gates, c_prev):
        # Full-vreg activations over all 4H lanes (one sigmoid + one tanh), then
        # static slices (all math in f32).
        sig = jax.nn.sigmoid(gates)
        tnh = jnp.tanh(gates)
        i_g = sig[:, 0 * H:1 * H]
        f_g = sig[:, 1 * H:2 * H]
        g_g = tnh[:, 2 * H:3 * H]
        o_g = sig[:, 3 * H:4 * H]
        c_new = f_g * c_prev + i_g * g_g
        h_new = o_g * jnp.tanh(c_new)
        return h_new, c_new

    total_steps = S + L - 1
    unroll = True if total_steps <= 16 else 8    # partial unroll for long sequences

    def step(s, carry):
        # Wavefront: at global step s, layer l processes timestep t = s - l.  The L
        # cells within one step are independent -> the LLO scheduler overlaps them.
        h_prev, c_prev = carry                   # tuples of L x (Bp, H) f32
        h_new_list, c_new_list = [], []
        for l in range(L):
            t = s - l
            valid = jnp.logical_and(t >= 0, t < S)
            if l == 0:
                t_c = jnp.clip(t, 0, S - 1)
                row = pl.multiple_of(t_c * Bp, Bp)          # aligned 8-sublane tile
                gates = (xp_ref[pl.ds(row, Bp), :] +
                         jnp.dot(h_prev[0].astype(jnp.bfloat16), w_hh[0],
                                 preferred_element_type=jnp.float32))
            else:
                # Input to layer l at timestep t is layer l-1's output at the same
                # timestep, produced one wavefront step earlier (old carry value).
                gates = (bias[l] +
                         jnp.dot(h_prev[l - 1].astype(jnp.bfloat16), w_ih[l],
                                 preferred_element_type=jnp.float32) +
                         jnp.dot(h_prev[l].astype(jnp.bfloat16), w_hh[l],
                                 preferred_element_type=jnp.float32))
            h_n, c_n = lstm_cell(gates, c_prev[l])
            # Mask wavefront-edge steps (t outside [0, S)).
            h_new_list.append(jnp.where(valid, h_n, h_prev[l]))
            c_new_list.append(jnp.where(valid, c_n, c_prev[l]))
        return tuple(h_new_list), tuple(c_new_list)

    h_init = tuple(h0_ref[l] for l in range(L))
    c_init = tuple(c0_ref[l] for l in range(L))
    h_fin, c_fin = lax.fori_loop(0, total_steps, step, (h_init, c_init),
                                 unroll=unroll)

    for l in range(L):
        hn_ref[l] = h_fin[l]
        cn_ref[l] = c_fin[l]

    # FC + sigmoid only for the last timestep of the last layer and only for the one
    # output column the caller consumes (off the recurrence critical path, kept f32).
    logits = (jnp.dot(h_fin[L - 1], wfc_ref[...],
                      preferred_element_type=jnp.float32) + bfc_ref[...])
    out_ref[...] = jax.nn.sigmoid(logits)


def sentiment_forward(text, h_state, params, *, batch, hidden_size):
    """Forward pass of SentimentNet.

    text:    (B, S) int32 token ids
    h_state: (h0, c0), each (L, B, H) float32
    returns: (output (B,), (h_n, c_n))
    """
    embed_table = params["embedding"]                    # (V, E)
    h0, c0 = h_state
    L, B, H = h0.shape
    S = text.shape[1]
    E = embed_table.shape[1]

    B_pad = ((B + 7) // 8) * 8                           # full 8-row sublane tile

    # Embedding lookup (gather) is glue -> plain JAX.
    embed = jnp.take(embed_table, text, axis=0)          # (B, S, E)
    # Pad batch to B_pad and pre-flatten time-major to (S*B_pad, E) so every per-step
    # kernel slice is an aligned (8, lane) tile and the kernel never reshapes across
    # (8,128) tile boundaries.  bf16: MXU-input only.
    embed_p = jnp.pad(embed, ((0, B_pad - B), (0, 0), (0, 0)))
    x_flat = jnp.transpose(embed_p, (1, 0, 2)).reshape(S * B_pad, E).astype(jnp.bfloat16)

    h0p = jnp.pad(h0, ((0, 0), (0, B_pad - B), (0, 0))).astype(jnp.float32)
    c0p = jnp.pad(c0, ((0, 0), (0, B_pad - B), (0, 0))).astype(jnp.float32)

    # Layout plumbing (free): pre-transpose weights so the kernel does jnp.dot(x, w)
    # with the 4H axis on lanes; pre-sum biases; bf16 for MXU operands, f32 elsewhere.
    w_ih = jnp.transpose(params["w_ih"], (0, 2, 1)).astype(jnp.bfloat16)   # (L, E, 4H)
    w_hh = jnp.transpose(params["w_hh"], (0, 2, 1)).astype(jnp.bfloat16)   # (L, H, 4H)
    b = (params["b_ih"] + params["b_hh"])[:, None, :].astype(jnp.float32)  # (L, 1, 4H)
    # Caller only ever consumes output.view(batch,-1)[:, -1] -> last FC column only.
    w_fc = params["w_fc"][-1:, :].T.astype(jnp.float32)                    # (H, 1)
    b_fc = params["b_fc"][:, -1:].astype(jnp.float32)                      # (1, 1)

    vmem = pl.BlockSpec(memory_space=pltpu.MemorySpace.VMEM)

    # Advisory cost estimate (new wavefront structure).
    flops = int(2 * S * B_pad * E * 4 * H                    # hoisted layer-0 proj
                + 2 * S * B_pad * H * 4 * H                  # layer-0 h @ W_hh
                + (L - 1) * 2 * S * B_pad * (E + H) * 4 * H  # layers >= 1 (two dots)
                + 2 * B_pad * H)                             # FC
    transcendentals = int(L * S * B_pad * (2 * 4 * H + H) + B_pad)
    in_bytes = sum(int(a.size) * a.dtype.itemsize
                   for a in (x_flat, h0p, c0p, w_ih, w_hh, b, w_fc, b_fc))
    out_bytes = (B_pad + 2 * L * B_pad * H) * 4
    scratch_bytes = S * B_pad * 4 * H * 4
    bytes_accessed = int(in_bytes + out_bytes)
    vmem_limit = int(min(64 * 1024 * 1024,
                         max(16 * 1024 * 1024,
                             2 * (in_bytes + out_bytes + scratch_bytes))))

    fc_out, h_n_p, c_n_p = pl.pallas_call(
        _sentiment_kernel,
        out_shape=(
            jax.ShapeDtypeStruct((B_pad, 1), jnp.float32),
            jax.ShapeDtypeStruct((L, B_pad, H), jnp.float32),
            jax.ShapeDtypeStruct((L, B_pad, H), jnp.float32),
        ),
        in_specs=[vmem] * 8,
        out_specs=(vmem, vmem, vmem),
        scratch_shapes=[
            pltpu.VMEM((S * B_pad, 4 * H), jnp.float32),     # hoisted layer-0 projection
        ],
        compiler_params=pltpu.CompilerParams(vmem_limit_bytes=vmem_limit),
        cost_estimate=pl.CostEstimate(flops=flops,
                                      transcendentals=transcendentals,
                                      bytes_accessed=bytes_accessed),
    )(x_flat, h0p, c0p, w_ih, w_hh, b, w_fc, b_fc)

    # output.view(batch, -1)[:, -1]  == sigmoid of the last FC feature at the last step.
    out = fc_out[:batch, 0]
    h_n = h_n_p[:, :B, :]
    c_n = c_n_p[:, :B, :]
    return out, (h_n, c_n)


def init_params(key, vocab_size, embed_size, hidden_size, layer, output_size):
    keys = jax.random.split(key, 8)
    scale = 0.1
    # LSTM input dim: embed_size for layer 0, hidden_size for layers > 0.
    # We require embed_size == hidden_size here so weights stack uniformly
    # (consistent with the module's vocab_size == embed_size quirk).
    assert embed_size == hidden_size
    params = {
        "embedding": scale * jax.random.normal(keys[0], (vocab_size, embed_size), jnp.float32),
        "w_ih": scale * jax.random.normal(keys[1], (layer, 4 * hidden_size, embed_size), jnp.float32),
        "w_hh": scale * jax.random.normal(keys[2], (layer, 4 * hidden_size, hidden_size), jnp.float32),
        "b_ih": scale * jax.random.normal(keys[3], (layer, 4 * hidden_size), jnp.float32),
        "b_hh": scale * jax.random.normal(keys[4], (layer, 4 * hidden_size), jnp.float32),
        "w_fc": scale * jax.random.normal(keys[5], (output_size, hidden_size), jnp.float32),
        "b_fc": scale * jax.random.normal(keys[6], (1, output_size), jnp.float32),
    }
    return params


if __name__ == "__main__":
    # Small shapes consistent with the module's forward.
    batch = 2
    seq = 8
    vocab_size = 32
    embed_size = 32      # == vocab_size (see note at top)
    hidden_size = 32
    layer = 2
    output_size = 1

    key = jax.random.PRNGKey(0)
    k_param, k_text = jax.random.split(key)

    params = init_params(k_param, vocab_size, embed_size, hidden_size, layer, output_size)
    text = jax.random.randint(k_text, (batch, seq), 0, vocab_size, dtype=jnp.int32)

    # init_hidden (LSTM branch): zero h0 / c0
    h0 = jnp.zeros((layer, batch, hidden_size), jnp.float32)
    c0 = jnp.zeros((layer, batch, hidden_size), jnp.float32)

    out, (h_n, c_n) = sentiment_forward(text, (h0, c0), params,
                                        batch=batch, hidden_size=hidden_size)
    jax.block_until_ready((out, h_n, c_n))

    assert out.shape == (batch,)
    assert h_n.shape == (layer, batch, hidden_size)
    assert c_n.shape == (layer, batch, hidden_size)
    assert bool(jnp.all(jnp.isfinite(out)))
    print("KERNEL_OK")
</pallas_src>

<mosaic_0001>
module attributes {stable_mosaic.version = 11 : i64} {
  func.func @_sentiment_kernel(%arg0: memref<64x32xbf16, #tpu.memory_space<vmem>>, %arg1: memref<2x8x32xf32, #tpu.memory_space<vmem>>, %arg2: memref<2x8x32xf32, #tpu.memory_space<vmem>>, %arg3: memref<2x32x128xbf16, #tpu.memory_space<vmem>>, %arg4: memref<2x32x128xbf16, #tpu.memory_space<vmem>>, %arg5: memref<2x1x128xf32, #tpu.memory_space<vmem>>, %arg6: memref<32x1xf32, #tpu.memory_space<vmem>>, %arg7: memref<1x1xf32, #tpu.memory_space<vmem>>, %arg8: memref<8x1xf32, #tpu.memory_space<vmem>>, %arg9: memref<2x8x32xf32, #tpu.memory_space<vmem>>, %arg10: memref<2x8x32xf32, #tpu.memory_space<vmem>>, %arg11: memref<64x128xf32, #tpu.memory_space<vmem>>) attributes {dimension_semantics = [], scalar_prefetch = 0 : i64, scratch_operands = 1 : i64, tpu.core_type = #tpu.core_type<tc>} {
    %c0 = arith.constant 0 : index
    %c0_0 = arith.constant 0 : index
    %c0_1 = arith.constant 0 : index
    %0 = vector.load %arg3[%c0, %c0_0, %c0_1] : memref<2x32x128xbf16, #tpu.memory_space<vmem>>, vector<1x32x128xbf16>
    %1 = vector.shape_cast %0 : vector<1x32x128xbf16> to vector<32x128xbf16>
    %c1 = arith.constant 1 : index
    %c0_2 = arith.constant 0 : index
    %c0_3 = arith.constant 0 : index
    %2 = vector.load %arg3[%c1, %c0_2, %c0_3] : memref<2x32x128xbf16, #tpu.memory_space<vmem>>, vector<1x32x128xbf16>
    %3 = vector.shape_cast %2 : vector<1x32x128xbf16> to vector<32x128xbf16>
    %c0_4 = arith.constant 0 : index
    %c0_5 = arith.constant 0 : index
    %c0_6 = arith.constant 0 : index
    %4 = vector.load %arg4[%c0_4, %c0_5, %c0_6] : memref<2x32x128xbf16, #tpu.memory_space<vmem>>, vector<1x32x128xbf16>
    %5 = vector.shape_cast %4 : vector<1x32x128xbf16> to vector<32x128xbf16>
    %c1_7 = arith.constant 1 : index
    %c0_8 = arith.constant 0 : index
    %c0_9 = arith.constant 0 : index
    %6 = vector.load %arg4[%c1_7, %c0_8, %c0_9] : memref<2x32x128xbf16, #tpu.memory_space<vmem>>, vector<1x32x128xbf16>
    %7 = vector.shape_cast %6 : vector<1x32x128xbf16> to vector<32x128xbf16>
    %c0_10 = arith.constant 0 : index
    %c0_11 = arith.constant 0 : index
    %c0_12 = arith.constant 0 : index
    %8 = vector.load %arg5[%c0_10, %c0_11, %c0_12] : memref<2x1x128xf32, #tpu.memory_space<vmem>>, vector<1x1x128xf32>
    %9 = vector.shape_cast %8 : vector<1x1x128xf32> to vector<1x128xf32>
    %c1_13 = arith.constant 1 : index
    %c0_14 = arith.constant 0 : index
    %c0_15 = arith.constant 0 : index
    %10 = vector.load %arg5[%c1_13, %c0_14, %c0_15] : memref<2x1x128xf32, #tpu.memory_space<vmem>>, vector<1x1x128xf32>
    %11 = vector.shape_cast %10 : vector<1x1x128xf32> to vector<1x128xf32>
    %c0_16 = arith.constant 0 : index
    %c0_17 = arith.constant 0 : index
    %12 = vector.load %arg0[%c0_16, %c0_17] : memref<64x32xbf16, #tpu.memory_space<vmem>>, vector<64x32xbf16>
    %cst = arith.constant dense<0.000000e+00> : vector<64x128xf32>
    %13 = tpu.matmul %12, %1, %cst {dimension_numbers = #tpu.dot_dimension_numbers<[1], [0], [0], [1], [0, 0, 1, 1], [], []>} : vector<64x32xbf16>, vector<32x128xbf16>, vector<64x128xf32> -> vector<64x128xf32>
    %14 = vector.broadcast %9 : vector<1x128xf32> to vector<64x128xf32>
    %15 = arith.addf %13, %14 : vector<64x128xf32>
    %c0_18 = arith.constant 0 : index
    %c0_19 = arith.constant 0 : index
    %16 = vector.load %arg11[%c0_18, %c0_19] : memref<64x128xf32, #tpu.memory_space<vmem>>, vector<64x128xf32>
    tpu.vector_store %arg11[%c0_18, %c0_19], %15 {strides = array<i32>} : memref<64x128xf32, #tpu.memory_space<vmem>>, vector<64x128xf32>,
    %c0_20 = arith.constant 0 : index
    %c0_21 = arith.constant 0 : index
    %c0_22 = arith.constant 0 : index
    %17 = vector.load %arg1[%c0_20, %c0_21, %c0_22] : memref<2x8x32xf32, #tpu.memory_space<vmem>>, vector<1x8x32xf32>
    %18 = vector.shape_cast %17 : vector<1x8x32xf32> to vector<8x32xf32>
    %c1_23 = arith.constant 1 : index
    %c0_24 = arith.constant 0 : index
    %c0_25 = arith.constant 0 : index
    %19 = vector.load %arg1[%c1_23, %c0_24, %c0_25] : memref<2x8x32xf32, #tpu.memory_space<vmem>>, vector<1x8x32xf32>
    %20 = vector.shape_cast %19 : vector<1x8x32xf32> to vector<8x32xf32>
    %c0_26 = arith.constant 0 : index
    %c0_27 = arith.constant 0 : index
    %c0_28 = arith.constant 0 : index
    %21 = vector.load %arg2[%c0_26, %c0_27, %c0_28] : memref<2x8x32xf32, #tpu.memory_space<vmem>>, vector<1x8x32xf32>
    %22 = vector.shape_cast %21 : vector<1x8x32xf32> to vector<8x32xf32>
    %c1_29 = arith.constant 1 : index
    %c0_30 = arith.constant 0 : index
    %c0_31 = arith.constant 0 : index
    %23 = vector.load %arg2[%c1_29, %c0_30, %c0_31] : memref<2x8x32xf32, #tpu.memory_space<vmem>>, vector<1x8x32xf32>
    %24 = vector.shape_cast %23 : vector<1x8x32xf32> to vector<8x32xf32>
    %c0_i32 = arith.constant 0 : i32
    %c0_i32_32 = arith.constant 0 : i32
    %25 = arith.subi %c0_i32, %c0_i32_32 : i32
    %c0_i32_33 = arith.constant 0 : i32
    %26 = arith.cmpi sge, %25, %c0_i32_33 : i32
    %c8_i32 = arith.constant 8 : i32
    %27 = arith.cmpi slt, %25, %c8_i32 : i32
    %28 = arith.andi %26, %27 : i1
    %c0_i32_34 = arith.constant 0 : i32
    %c7_i32 = arith.constant 7 : i32
    %29 = arith.maxsi %c0_i32_34, %25 : i32
    %30 = arith.minsi %c7_i32, %29 : i32
    %c8_i32_35 = arith.constant 8 : i32
    %31 = arith.muli %30, %c8_i32_35 : i32
    %32 = tpu.assume_multiple %31, 8 : i32
    %33 = arith.index_cast %32 : i32 to index
    %c0_36 = arith.constant 0 : index
    %34 = vector.load %arg11[%33, %c0_36] : memref<64x128xf32, #tpu.memory_space<vmem>>, vector<8x128xf32>
    %35 = arith.truncf %18 : vector<8x32xf32> to vector<8x32xbf16>
    %cst_37 = arith.constant dense<0.000000e+00> : vector<8x128xf32>
    %36 = tpu.matmul %35, %5, %cst_37 {dimension_numbers = #tpu.dot_dimension_numbers<[1], [0], [0], [1], [0, 0, 1, 1], [], []>} : vector<8x32xbf16>, vector<32x128xbf16>, vector<8x128xf32> -> vector<8x128xf32>
    %37 = arith.addf %34, %36 : vector<8x128xf32>
    %38 = arith.negf %37 : vector<8x128xf32>
    %39 = math.exp %38 : vector<8x128xf32>
    %cst_38 = arith.constant 1.000000e+00 : f32
    %40 = vector.broadcast %cst_38 : f32 to vector<8x128xf32>
    %41 = arith.addf %40, %39 : vector<8x128xf32>
    %42 = arith.divf %40, %41 : vector<8x128xf32>
    %43 = math.tanh %37 : vector<8x128xf32>
    %44 = vector.extract_strided_slice %42 {offsets = [0, 0], sizes = [8, 32], strides = [1, 1]} : vector<8x128xf32> to vector<8x32xf32>
    %45 = vector.extract_strided_slice %42 {offsets = [0, 32], sizes = [8, 32], strides = [1, 1]} : vector<8x128xf32> to vector<8x32xf32>
    %46 = vector.extract_strided_slice %43 {offsets = [0, 64], sizes = [8, 32], strides = [1, 1]} : vector<8x128xf32> to vector<8x32xf32>
    %47 = vector.extract_strided_slice %42 {offsets = [0, 96], sizes = [8, 32], strides = [1, 1]} : vector<8x128xf32> to vector<8x32xf32>
    %48 = arith.mulf %45, %22 : vector<8x32xf32>
    %49 = arith.mulf %44, %46 : vector<8x32xf32>
    %50 = arith.addf %48, %49 : vector<8x32xf32>
    %51 = math.tanh %50 : vector<8x32xf32>
    %52 = arith.mulf %47, %51 : vector<8x32xf32>
    %53 = arith.select %28, %52, %18 : vector<8x32xf32>
    %54 = arith.select %28, %50, %22 : vector<8x32xf32>
    %c1_i32 = arith.constant 1 : i32
    %55 = arith.subi %c0_i32, %c1_i32 : i32
    %c0_i32_39 = arith.constant 0 : i32
    %56 = arith.cmpi sge, %55, %c0_i32_39 : i32
    %c8_i32_40 = arith.constant 8 : i32
    %57 = arith.cmpi slt, %55, %c8_i32_40 : i32
    %58 = arith.andi %56, %57 : i1
    %59 = arith.truncf %18 : vector<8x32xf32> to vector<8x32xbf16>
    %cst_41 = arith.constant dense<0.000000e+00> : vector<8x128xf32>
    %60 = tpu.matmul %59, %3, %cst_41 {dimension_numbers = #tpu.dot_dimension_numbers<[1], [0], [0], [1], [0, 0, 1, 1], [], []>} : vector<8x32xbf16>, vector<32x128xbf16>, vector<8x128xf32> -> vector<8x128xf32>
    %61 = vector.broadcast %11 : vector<1x128xf32> to vector<8x128xf32>
    %62 = arith.addf %61, %60 : vector<8x128xf32>
    %63 = arith.truncf %20 : vector<8x32xf32> to vector<8x32xbf16>
    %cst_42 = arith.constant dense<0.000000e+00> : vector<8x128xf32>
    %64 = tpu.matmul %63, %7, %cst_42 {dimension_numbers = #tpu.dot_dimension_numbers<[1], [0], [0], [1], [0, 0, 1, 1], [], []>} : vector<8x32xbf16>, vector<32x128xbf16>, vector<8x128xf32> -> vector<8x128xf32>
    %65 = arith.addf %62, %64 : vector<8x128xf32>
    %66 = arith.negf %65 : vector<8x128xf32>
    %67 = math.exp %66 : vector<8x128xf32>
    %cst_43 = arith.constant 1.000000e+00 : f32
    %68 = vector.broadcast %cst_43 : f32 to vector<8x128xf32>
    %69 = arith.addf %68, %67 : vector<8x128xf32>
    %70 = arith.divf %68, %69 : vector<8x128xf32>
    %71 = math.tanh %65 : vector<8x128xf32>
    %72 = vector.extract_strided_slice %70 {offsets = [0, 0], sizes = [8, 32], strides = [1, 1]} : vector<8x128xf32> to vector<8x32xf32>
    %73 = vector.extract_strided_slice %70 {offsets = [0, 32], sizes = [8, 32], strides = [1, 1]} : vector<8x128xf32> to vector<8x32xf32>
    %74 = vector.extract_strided_slice %71 {offsets = [0, 64], sizes = [8, 32], strides = [1, 1]} : vector<8x128xf32> to vector<8x32xf32>
    %75 = vector.extract_strided_slice %70 {offsets = [0, 96], sizes = [8, 32], strides = [1, 1]} : vector<8x128xf32> to vector<8x32xf32>
    %76 = arith.mulf %73, %24 : vector<8x32xf32>
    %77 = arith.mulf %72, %74 : vector<8x32xf32>
    %78 = arith.addf %76, %77 : vector<8x32xf32>
    %79 = math.tanh %78 : vector<8x32xf32>
    %80 = arith.mulf %75, %79 : vector<8x32xf32>
    %81 = arith.select %58, %80, %20 : vector<8x32xf32>
    %82 = arith.select %58, %78, %24 : vector<8x32xf32>
    %c1_i32_44 = arith.constant 1 : i32
    %c0_i32_45 = arith.constant 0 : i32
    %83 = arith.subi %c1_i32_44, %c0_i32_45 : i32
    %c0_i32_46 = arith.constant 0 : i32
    %84 = arith.cmpi sge, %83, %c0_i32_46 : i32
    %c8_i32_47 = arith.constant 8 : i32
    %85 = arith.cmpi slt, %83, %c8_i32_47 : i32
    %86 = arith.andi %84, %85 : i1
    %c0_i32_48 = arith.constant 0 : i32
    %c7_i32_49 = arith.constant 7 : i32
    %87 = arith.maxsi %c0_i32_48, %83 : i32
    %88 = arith.minsi %c7_i32_49, %87 : i32
    %c8_i32_50 = arith.constant 8 : i32
    %89 = arith.muli %88, %c8_i32_50 : i32
    %90 = tpu.assume_multiple %89, 8 : i32
    %91 = arith.index_cast %90 : i32 to index
    %c0_51 = arith.constant 0 : index
    %92 = vector.load %arg11[%91, %c0_51] : memref<64x128xf32, #tpu.memory_space<vmem>>, vector<8x128xf32>
    %93 = arith.truncf %53 : vector<8x32xf32> to vector<8x32xbf16>
    %cst_52 = arith.constant dense<0.000000e+00> : vector<8x128xf32>
    %94 = tpu.matmul %93, %5, %cst_52 {dimension_numbers = #tpu.dot_dimension_numbers<[1], [0], [0], [1], [0, 0, 1, 1], [], []>} : vector<8x32xbf16>, vector<32x128xbf16>, vector<8x128xf32> -> vector<8x128xf32>
    %95 = arith.addf %92, %94 : vector<8x128xf32>
    %96 = arith.negf %95 : vector<8x128xf32>
    %97 = math.exp %96 : vector<8x128xf32>
    %cst_53 = arith.constant 1.000000e+00 : f32
    %98 = vector.broadcast %cst_53 : f32 to vector<8x128xf32>
    %99 = arith.addf %98, %97 : vector<8x128xf32>
    %100 = arith.divf %98, %99 : vector<8x128xf32>
    %101 = math.tanh %95 : vector<8x128xf32>
    %102 = vector.extract_strided_slice %100 {offsets = [0, 0], sizes = [8, 32], strides = [1, 1]} : vector<8x128xf32> to vector<8x32xf32>
    %103 = vector.extract_strided_slice %100 {offsets = [0, 32], sizes = [8, 32], strides = [1, 1]} : vector<8x128xf32> to vector<8x32xf32>
    %104 = vector.extract_strided_slice %101 {offsets = [0, 64], sizes = [8, 32], strides = [1, 1]} : vector<8x128xf32> to vector<8x32xf32>
    %105 = vector.extract_strided_slice %100 {offsets = [0, 96], sizes = [8, 32], strides = [1, 1]} : vector<8x128xf32> to vector<8x32xf32>
    %106 = arith.mulf %103, %54 : vector<8x32xf32>
    %107 = arith.mulf %102, %104 : vector<8x32xf32>
    %108 = arith.addf %106, %107 : vector<8x32xf32>
    %109 = math.tanh %108 : vector<8x32xf32>
    %110 = arith.mulf %105, %109 : vector<8x32xf32>
    %111 = arith.select %86, %110, %53 : vector<8x32xf32>
    %112 = arith.select %86, %108, %54 : vector<8x32xf32>
    %c1_i32_54 = arith.constant 1 : i32
    %113 = arith.subi %c1_i32_44, %c1_i32_54 : i32
    %c0_i32_55 = arith.constant 0 : i32
    %114 = arith.cmpi sge, %113, %c0_i32_55 : i32
    %c8_i32_56 = arith.constant 8 : i32
    %115 = arith.cmpi slt, %113, %c8_i32_56 : i32
    %116 = arith.andi %114, %115 : i1
    %117 = arith.truncf %53 : vector<8x32xf32> to vector<8x32xbf16>
    %cst_57 = arith.constant dense<0.000000e+00> : vector<8x128xf32>
    %118 = tpu.matmul %117, %3, %cst_57 {dimension_numbers = #tpu.dot_dimension_numbers<[1], [0], [0], [1], [0, 0, 1, 1], [], []>} : vector<8x32xbf16>, vector<32x128xbf16>, vector<8x128xf32> -> vector<8x128xf32>
    %119 = vector.broadcast %11 : vector<1x128xf32> to vector<8x128xf32>
    %120 = arith.addf %119, %118 : vector<8x128xf32>
    %121 = arith.truncf %81 : vector<8x32xf32> to vector<8x32xbf16>
    %cst_58 = arith.constant dense<0.000000e+00> : vector<8x128xf32>
    %122 = tpu.matmul %121, %7, %cst_58 {dimension_numbers = #tpu.dot_dimension_numbers<[1], [0], [0], [1], [0, 0, 1, 1], [], []>} : vector<8x32xbf16>, vector<32x128xbf16>, vector<8x128xf32> -> vector<8x128xf32>
    %123 = arith.addf %120, %122 : vector<8x128xf32>
    %124 = arith.negf %123 : vector<8x128xf32>
    %125 = math.exp %124 : vector<8x128xf32>
    %cst_59 = arith.constant 1.000000e+00 : f32
    %126 = vector.broadcast %cst_59 : f32 to vector<8x128xf32>
    %127 = arith.addf %126, %125 : vector<8x128xf32>
    %128 = arith.divf %126, %127 : vector<8x128xf32>
    %129 = math.tanh %123 : vector<8x128xf32>
    %130 = vector.extract_strided_slice %128 {offsets = [0, 0], sizes = [8, 32], strides = [1, 1]} : vector<8x128xf32> to vector<8x32xf32>
    %131 = vector.extract_strided_slice %128 {offsets = [0, 32], sizes = [8, 32], strides = [1, 1]} : vector<8x128xf32> to vector<8x32xf32>
    %132 = vector.extract_strided_slice %129 {offsets = [0, 64], sizes = [8, 32], strides = [1, 1]} : vector<8x128xf32> to vector<8x32xf32>
    %133 = vector.extract_strided_slice %128 {offsets = [0, 96], sizes = [8, 32], strides = [1, 1]} : vector<8x128xf32> to vector<8x32xf32>
    %134 = arith.mulf %131, %82 : vector<8x32xf32>
    %135 = arith.mulf %130, %132 : vector<8x32xf32>
    %136 = arith.addf %134, %135 : vector<8x32xf32>
    %137 = math.tanh %136 : vector<8x32xf32>
    %138 = arith.mulf %133, %137 : vector<8x32xf32>
    %139 = arith.select %116, %138, %81 : vector<8x32xf32>
    %140 = arith.select %116, %136, %82 : vector<8x32xf32>
    %c2_i32 = arith.constant 2 : i32
    %c0_i32_60 = arith.constant 0 : i32
    %141 = arith.subi %c2_i32, %c0_i32_60 : i32
    %c0_i32_61 = arith.constant 0 : i32
    %142 = arith.cmpi sge, %141, %c0_i32_61 : i32
    %c8_i32_62 = arith.constant 8 : i32
    %143 = arith.cmpi slt, %141, %c8_i32_62 : i32
    %144 = arith.andi %142, %143 : i1
    %c0_i32_63 = arith.constant 0 : i32
    %c7_i32_64 = arith.constant 7 : i32
    %145 = arith.maxsi %c0_i32_63, %141 : i32
    %146 = arith.minsi %c7_i32_64, %145 : i32
    %c8_i32_65 = arith.constant 8 : i32
    %147 = arith.muli %146, %c8_i32_65 : i32
    %148 = tpu.assume_multiple %147, 8 : i32
    %149 = arith.index_cast %148 : i32 to index
    %c0_66 = arith.constant 0 : index
    %150 = vector.load %arg11[%149, %c0_66] : memref<64x128xf32, #tpu.memory_space<vmem>>, vector<8x128xf32>
    %151 = arith.truncf %111 : vector<8x32xf32> to vector<8x32xbf16>
    %cst_67 = arith.constant dense<0.000000e+00> : vector<8x128xf32>
    %152 = tpu.matmul %151, %5, %cst_67 {dimension_numbers = #tpu.dot_dimension_numbers<[1], [0], [0], [1], [0, 0, 1, 1], [], []>} : vector<8x32xbf16>, vector<32x128xbf16>, vector<8x128xf32> -> vector<8x128xf32>
    %153 = arith.addf %150, %152 : vector<8x128xf32>
    %154 = arith.negf %153 : vector<8x128xf32>
    %155 = math.exp %154 : vector<8x128xf32>
    %cst_68 = arith.constant 1.000000e+00 : f32
    %156 = vector.broadcast %cst_68 : f32 to vector<8x128xf32>
    %157 = arith.addf %156, %155 : vector<8x128xf32>
    %158 = arith.divf %156, %157 : vector<8x128xf32>
    %159 = math.tanh %153 : vector<8x128xf32>
    %160 = vector.extract_strided_slice %158 {offsets = [0, 0], sizes = [8, 32], strides = [1, 1]} : vector<8x128xf32> to vector<8x32xf32>
    %161 = vector.extract_strided_slice %158 {offsets = [0, 32], sizes = [8, 32], strides = [1, 1]} : vector<8x128xf32> to vector<8x32xf32>
    %162 = vector.extract_strided_slice %159 {offsets = [0, 64], sizes = [8, 32], strides = [1, 1]} : vector<8x128xf32> to vector<8x32xf32>
    %163 = vector.extract_strided_slice %158 {offsets = [0, 96], sizes = [8, 32], strides = [1, 1]} : vector<8x128xf32> to vector<8x32xf32>
    %164 = arith.mulf %161, %112 : vector<8x32xf32>
    %165 = arith.mulf %160, %162 : vector<8x32xf32>
    %166 = arith.addf %164, %165 : vector<8x32xf32>
    %167 = math.tanh %166 : vector<8x32xf32>
    %168 = arith.mulf %163, %167 : vector<8x32xf32>
    %169 = arith.select %144, %168, %111 : vector<8x32xf32>
    %170 = arith.select %144, %166, %112 : vector<8x32xf32>
    %c1_i32_69 = arith.constant 1 : i32
    %171 = arith.subi %c2_i32, %c1_i32_69 : i32
    %c0_i32_70 = arith.constant 0 : i32
    %172 = arith.cmpi sge, %171, %c0_i32_70 : i32
    %c8_i32_71 = arith.constant 8 : i32
    %173 = arith.cmpi slt, %171, %c8_i32_71 : i32
    %174 = arith.andi %172, %173 : i1
    %175 = arith.truncf %111 : vector<8x32xf32> to vector<8x32xbf16>
    %cst_72 = arith.constant dense<0.000000e+00> : vector<8x128xf32>
    %176 = tpu.matmul %175, %3, %cst_72 {dimension_numbers = #tpu.dot_dimension_numbers<[1], [0], [0], [1], [0, 0, 1, 1], [], []>} : vector<8x32xbf16>, vector<32x128xbf16>, vector<8x128xf32> -> vector<8x128xf32>
    %177 = vector.broadcast %11 : vector<1x128xf32> to vector<8x128xf32>
    %178 = arith.addf %177, %176 : vector<8x128xf32>
    %179 = arith.truncf %139 : vector<8x32xf32> to vector<8x32xbf16>
    %cst_73 = arith.constant dense<0.000000e+00> : vector<8x128xf32>
    %180 = tpu.matmul %179, %7, %cst_73 {dimension_numbers = #tpu.dot_dimension_numbers<[1], [0], [0], [1], [0, 0, 1, 1], [], []>} : vector<8x32xbf16>, vector<32x128xbf16>, vector<8x128xf32> -> vector<8x128xf32>
    %181 = arith.addf %178, %180 : vector<8x128xf32>
    %182 = arith.negf %181 : vector<8x128xf32>
    %183 = math.exp %182 : vector<8x128xf32>
    %cst_74 = arith.constant 1.000000e+00 : f32
    %184 = vector.broadcast %cst_74 : f32 to vector<8x128xf32>
    %185 = arith.addf %184, %183 : vector<8x128xf32>
    %186 = arith.divf %184, %185 : vector<8x128xf32>
    %187 = math.tanh %181 : vector<8x128xf32>
    %188 = vector.extract_strided_slice %186 {offsets = [0, 0], sizes = [8, 32], strides = [1, 1]} : vector<8x128xf32> to vector<8x32xf32>
    %189 = vector.extract_strided_slice %186 {offsets = [0, 32], sizes = [8, 32], strides = [1, 1]} : vector<8x128xf32> to vector<8x32xf32>
    %190 = vector.extract_strided_slice %187 {offsets = [0, 64], sizes = [8, 32], strides = [1, 1]} : vector<8x128xf32> to vector<8x32xf32>
    %191 = vector.extract_strided_slice %186 {offsets = [0, 96], sizes = [8, 32], strides = [1, 1]} : vector<8x128xf32> to vector<8x32xf32>
    %192 = arith.mulf %189, %140 : vector<8x32xf32>
    %193 = arith.mulf %188, %190 : vector<8x32xf32>
    %194 = arith.addf %192, %193 : vector<8x32xf32>
    %195 = math.tanh %194 : vector<8x32xf32>
    %196 = arith.mulf %191, %195 : vector<8x32xf32>
    %197 = arith.select %174, %196, %139 : vector<8x32xf32>
    %198 = arith.select %174, %194, %140 : vector<8x32xf32>
    %c3_i32 = arith.constant 3 : i32
    %c0_i32_75 = arith.constant 0 : i32
    %199 = arith.subi %c3_i32, %c0_i32_75 : i32
    %c0_i32_76 = arith.constant 0 : i32
    %200 = arith.cmpi sge, %199, %c0_i32_76 : i32
    %c8_i32_77 = arith.constant 8 : i32
    %201 = arith.cmpi slt, %199, %c8_i32_77 : i32
    %202 = arith.andi %200, %201 : i1
    %c0_i32_78 = arith.constant 0 : i32
    %c7_i32_79 = arith.constant 7 : i32
    %203 = arith.maxsi %c0_i32_78, %199 : i32
    %204 = arith.minsi %c7_i32_79, %203 : i32
    %c8_i32_80 = arith.constant 8 : i32
    %205 = arith.muli %204, %c8_i32_80 : i32
    %206 = tpu.assume_multiple %205, 8 : i32
    %207 = arith.index_cast %206 : i32 to index
    %c0_81 = arith.constant 0 : index
    %208 = vector.load %arg11[%207, %c0_81] : memref<64x128xf32, #tpu.memory_space<vmem>>, vector<8x128xf32>
    %209 = arith.truncf %169 : vector<8x32xf32> to vector<8x32xbf16>
    %cst_82 = arith.constant dense<0.000000e+00> : vector<8x128xf32>
    %210 = tpu.matmul %209, %5, %cst_82 {dimension_numbers = #tpu.dot_dimension_numbers<[1], [0], [0], [1], [0, 0, 1, 1], [], []>} : vector<8x32xbf16>, vector<32x128xbf16>, vector<8x128xf32> -> vector<8x128xf32>
    %211 = arith.addf %208, %210 : vector<8x128xf32>
    %212 = arith.negf %211 : vector<8x128xf32>
    %213 = math.exp %212 : vector<8x128xf32>
    %cst_83 = arith.constant 1.000000e+00 : f32
    %214 = vector.broadcast %cst_83 : f32 to vector<8x128xf32>
    %215 = arith.addf %214, %213 : vector<8x128xf32>
    %216 = arith.divf %214, %215 : vector<8x128xf32>
    %217 = math.tanh %211 : vector<8x128xf32>
    %218 = vector.extract_strided_slice %216 {offsets = [0, 0], sizes = [8, 32], strides = [1, 1]} : vector<8x128xf32> to vector<8x32xf32>
    %219 = vector.extract_strided_slice %216 {offsets = [0, 32], sizes = [8, 32], strides = [1, 1]} : vector<8x128xf32> to vector<8x32xf32>
    %220 = vector.extract_strided_slice %217 {offsets = [0, 64], sizes = [8, 32], strides = [1, 1]} : vector<8x128xf32> to vector<8x32xf32>
    %221 = vector.extract_strided_slice %216 {offsets = [0, 96], sizes = [8, 32], strides = [1, 1]} : vector<8x128xf32> to vector<8x32xf32>
    %222 = arith.mulf %219, %170 : vector<8x32xf32>
    %223 = arith.mulf %218, %220 : vector<8x32xf32>
    %224 = arith.addf %222, %223 : vector<8x32xf32>
    %225 = math.tanh %224 : vector<8x32xf32>
    %226 = arith.mulf %221, %225 : vector<8x32xf32>
    %227 = arith.select %202, %226, %169 : vector<8x32xf32>
    %228 = arith.select %202, %224, %170 : vector<8x32xf32>
    %c1_i32_84 = arith.constant 1 : i32
    %229 = arith.subi %c3_i32, %c1_i32_84 : i32
    %c0_i32_85 = arith.constant 0 : i32
    %230 = arith.cmpi sge, %229, %c0_i32_85 : i32
    %c8_i32_86 = arith.constant 8 : i32
    %231 = arith.cmpi slt, %229, %c8_i32_86 : i32
    %232 = arith.andi %230, %231 : i1
    %233 = arith.truncf %169 : vector<8x32xf32> to vector<8x32xbf16>
    %cst_87 = arith.constant dense<0.000000e+00> : vector<8x128xf32>
    %234 = tpu.matmul %233, %3, %cst_87 {dimension_numbers = #tpu.dot_dimension_numbers<[1], [0], [0], [1], [0, 0, 1, 1], [], []>} : vector<8x32xbf16>, vector<32x128xbf16>, vector<8x128xf32> -> vector<8x128xf32>
    %235 = vector.broadcast %11 : vector<1x128xf32> to vector<8x128xf32>
    %236 = arith.addf %235, %234 : vector<8x128xf32>
    %237 = arith.truncf %197 : vector<8x32xf32> to vector<8x32xbf16>
    %cst_88 = arith.constant dense<0.000000e+00> : vector<8x128xf32>
    %238 = tpu.matmul %237, %7, %cst_88 {dimension_numbers = #tpu.dot_dimension_numbers<[1], [0], [0], [1], [0, 0, 1, 1], [], []>} : vector<8x32xbf16>, vector<32x128xbf16>, vector<8x128xf32> -> vector<8x128xf32>
    %239 = arith.addf %236, %238 : vector<8x128xf32>
    %240 = arith.negf %239 : vector<8x128xf32>
    %241 = math.exp %240 : vector<8x128xf32>
    %cst_89 = arith.constant 1.000000e+00 : f32
    %242 = vector.broadcast %cst_89 : f32 to vector<8x128xf32>
    %243 = arith.addf %242, %241 : vector<8x128xf32>
    %244 = arith.divf %242, %243 : vector<8x128xf32>
    %245 = math.tanh %239 : vector<8x128xf32>
    %246 = vector.extract_strided_slice %244 {offsets = [0, 0], sizes = [8, 32], strides = [1, 1]} : vector<8x128xf32> to vector<8x32xf32>
    %247 = vector.extract_strided_slice %244 {offsets = [0, 32], sizes = [8, 32], strides = [1, 1]} : vector<8x128xf32> to vector<8x32xf32>
    %248 = vector.extract_strided_slice %245 {offsets = [0, 64], sizes = [8, 32], strides = [1, 1]} : vector<8x128xf32> to vector<8x32xf32>
    %249 = vector.extract_strided_slice %244 {offsets = [0, 96], sizes = [8, 32], strides = [1, 1]} : vector<8x128xf32> to vector<8x32xf32>
    %250 = arith.mulf %247, %198 : vector<8x32xf32>
    %251 = arith.mulf %246, %248 : vector<8x32xf32>
    %252 = arith.addf %250, %251 : vector<8x32xf32>
    %253 = math.tanh %252 : vector<8x32xf32>
    %254 = arith.mulf %249, %253 : vector<8x32xf32>
    %255 = arith.select %232, %254, %197 : vector<8x32xf32>
    %256 = arith.select %232, %252, %198 : vector<8x32xf32>
    %c4_i32 = arith.constant 4 : i32
    %c0_i32_90 = arith.constant 0 : i32
    %257 = arith.subi %c4_i32, %c0_i32_90 : i32
    %c0_i32_91 = arith.constant 0 : i32
    %258 = arith.cmpi sge, %257, %c0_i32_91 : i32
    %c8_i32_92 = arith.constant 8 : i32
    %259 = arith.cmpi slt, %257, %c8_i32_92 : i32
    %260 = arith.andi %258, %259 : i1
    %c0_i32_93 = arith.constant 0 : i32
    %c7_i32_94 = arith.constant 7 : i32
    %261 = arith.maxsi %c0_i32_93, %257 : i32
    %262 = arith.minsi %c7_i32_94, %261 : i32
    %c8_i32_95 = arith.constant 8 : i32
    %263 = arith.muli %262, %c8_i32_95 : i32
    %264 = tpu.assume_multiple %263, 8 : i32
    %265 = arith.index_cast %264 : i32 to index
    %c0_96 = arith.constant 0 : index
    %266 = vector.load %arg11[%265, %c0_96] : memref<64x128xf32, #tpu.memory_space<vmem>>, vector<8x128xf32>
    %267 = arith.truncf %227 : vector<8x32xf32> to vector<8x32xbf16>
    %cst_97 = arith.constant dense<0.000000e+00> : vector<8x128xf32>
    %268 = tpu.matmul %267, %5, %cst_97 {dimension_numbers = #tpu.dot_dimension_numbers<[1], [0], [0], [1], [0, 0, 1, 1], [], []>} : vector<8x32xbf16>, vector<32x128xbf16>, vector<8x128xf32> -> vector<8x128xf32>
    %269 = arith.addf %266, %268 : vector<8x128xf32>
    %270 = arith.negf %269 : vector<8x128xf32>
    %271 = math.exp %270 : vector<8x128xf32>
    %cst_98 = arith.constant 1.000000e+00 : f32
    %272 = vector.broadcast %cst_98 : f32 to vector<8x128xf32>
    %273 = arith.addf %272, %271 : vector<8x128xf32>
    %274 = arith.divf %272, %273 : vector<8x128xf32>
    %275 = math.tanh %269 : vector<8x128xf32>
    %276 = vector.extract_strided_slice %274 {offsets = [0, 0], sizes = [8, 32], strides = [1, 1]} : vector<8x128xf32> to vector<8x32xf32>
    %277 = vector.extract_strided_slice %274 {offsets = [0, 32], sizes = [8, 32], strides = [1, 1]} : vector<8x128xf32> to vector<8x32xf32>
    %278 = vector.extract_strided_slice %275 {offsets = [0, 64], sizes = [8, 32], strides = [1, 1]} : vector<8x128xf32> to vector<8x32xf32>
    %279 = vector.extract_strided_slice %274 {offsets = [0, 96], sizes = [8, 32], strides = [1, 1]} : vector<8x128xf32> to vector<8x32xf32>
    %280 = arith.mulf %277, %228 : vector<8x32xf32>
    %281 = arith.mulf %276, %278 : vector<8x32xf32>
    %282 = arith.addf %280, %281 : vector<8x32xf32>
    %283 = math.tanh %282 : vector<8x32xf32>
    %284 = arith.mulf %279, %283 : vector<8x32xf32>
    %285 = arith.select %260, %284, %227 : vector<8x32xf32>
    %286 = arith.select %260, %282, %228 : vector<8x32xf32>
    %c1_i32_99 = arith.constant 1 : i32
    %287 = arith.subi %c4_i32, %c1_i32_99 : i32
    %c0_i32_100 = arith.constant 0 : i32
    %288 = arith.cmpi sge, %287, %c0_i32_100 : i32
    %c8_i32_101 = arith.constant 8 : i32
    %289 = arith.cmpi slt, %287, %c8_i32_101 : i32
    %290 = arith.andi %288, %289 : i1
    %291 = arith.truncf %227 : vector<8x32xf32> to vector<8x32xbf16>
    %cst_102 = arith.constant dense<0.000000e+00> : vector<8x128xf32>
    %292 = tpu.matmul %291, %3, %cst_102 {dimension_numbers = #tpu.dot_dimension_numbers<[1], [0], [0], [1], [0, 0, 1, 1], [], []>} : vector<8x32xbf16>, vector<32x128xbf16>, vector<8x128xf32> -> vector<8x128xf32>
    %293 = vector.broadcast %11 : vector<1x128xf32> to vector<8x128xf32>
    %294 = arith.addf %293, %292 : vector<8x128xf32>
    %295 = arith.truncf %255 : vector<8x32xf32> to vector<8x32xbf16>
    %cst_103 = arith.constant dense<0.000000e+00> : vector<8x128xf32>
    %296 = tpu.matmul %295, %7, %cst_103 {dimension_numbers = #tpu.dot_dimension_numbers<[1], [0], [0], [1], [0, 0, 1, 1], [], []>} : vector<8x32xbf16>, vector<32x128xbf16>, vector<8x128xf32> -> vector<8x128xf32>
    %297 = arith.addf %294, %296 : vector<8x128xf32>
    %298 = arith.negf %297 : vector<8x128xf32>
    %299 = math.exp %298 : vector<8x128xf32>
    %cst_104 = arith.constant 1.000000e+00 : f32
    %300 = vector.broadcast %cst_104 : f32 to vector<8x128xf32>
    %301 = arith.addf %300, %299 : vector<8x128xf32>
    %302 = arith.divf %300, %301 : vector<8x128xf32>
    %303 = math.tanh %297 : vector<8x128xf32>
    %304 = vector.extract_strided_slice %302 {offsets = [0, 0], sizes = [8, 32], strides = [1, 1]} : vector<8x128xf32> to vector<8x32xf32>
    %305 = vector.extract_strided_slice %302 {offsets = [0, 32], sizes = [8, 32], strides = [1, 1]} : vector<8x128xf32> to vector<8x32xf32>
    %306 = vector.extract_strided_slice %303 {offsets = [0, 64], sizes = [8, 32], strides = [1, 1]} : vector<8x128xf32> to vector<8x32xf32>
    %307 = vector.extract_strided_slice %302 {offsets = [0, 96], sizes = [8, 32], strides = [1, 1]} : vector<8x128xf32> to vector<8x32xf32>
    %308 = arith.mulf %305, %256 : vector<8x32xf32>
    %309 = arith.mulf %304, %306 : vector<8x32xf32>
    %310 = arith.addf %308, %309 : vector<8x32xf32>
    %311 = math.tanh %310 : vector<8x32xf32>
    %312 = arith.mulf %307, %311 : vector<8x32xf32>
    %313 = arith.select %290, %312, %255 : vector<8x32xf32>
    %314 = arith.select %290, %310, %256 : vector<8x32xf32>
    %c5_i32 = arith.constant 5 : i32
    %c0_i32_105 = arith.constant 0 : i32
    %315 = arith.subi %c5_i32, %c0_i32_105 : i32
    %c0_i32_106 = arith.constant 0 : i32
    %316 = arith.cmpi sge, %315, %c0_i32_106 : i32
    %c8_i32_107 = arith.constant 8 : i32
    %317 = arith.cmpi slt, %315, %c8_i32_107 : i32
    %318 = arith.andi %316, %317 : i1
    %c0_i32_108 = arith.constant 0 : i32
    %c7_i32_109 = arith.constant 7 : i32
    %319 = arith.maxsi %c0_i32_108, %315 : i32
    %320 = arith.minsi %c7_i32_109, %319 : i32
    %c8_i32_110 = arith.constant 8 : i32
    %321 = arith.muli %320, %c8_i32_110 : i32
    %322 = tpu.assume_multiple %321, 8 : i32
    %323 = arith.index_cast %322 : i32 to index
    %c0_111 = arith.constant 0 : index
    %324 = vector.load %arg11[%323, %c0_111] : memref<64x128xf32, #tpu.memory_space<vmem>>, vector<8x128xf32>
    %325 = arith.truncf %285 : vector<8x32xf32> to vector<8x32xbf16>
    %cst_112 = arith.constant dense<0.000000e+00> : vector<8x128xf32>
    %326 = tpu.matmul %325, %5, %cst_112 {dimension_numbers = #tpu.dot_dimension_numbers<[1], [0], [0], [1], [0, 0, 1, 1], [], []>} : vector<8x32xbf16>, vector<32x128xbf16>, vector<8x128xf32> -> vector<8x128xf32>
    %327 = arith.addf %324, %326 : vector<8x128xf32>
    %328 = arith.negf %327 : vector<8x128xf32>
    %329 = math.exp %328 : vector<8x128xf32>
    %cst_113 = arith.constant 1.000000e+00 : f32
    %330 = vector.broadcast %cst_113 : f32 to vector<8x128xf32>
    %331 = arith.addf %330, %329 : vector<8x128xf32>
    %332 = arith.divf %330, %331 : vector<8x128xf32>
    %333 = math.tanh %327 : vector<8x128xf32>
    %334 = vector.extract_strided_slice %332 {offsets = [0, 0], sizes = [8, 32], strides = [1, 1]} : vector<8x128xf32> to vector<8x32xf32>
    %335 = vector.extract_strided_slice %332 {offsets = [0, 32], sizes = [8, 32], strides = [1, 1]} : vector<8x128xf32> to vector<8x32xf32>
    %336 = vector.extract_strided_slice %333 {offsets = [0, 64], sizes = [8, 32], strides = [1, 1]} : vector<8x128xf32> to vector<8x32xf32>
    %337 = vector.extract_strided_slice %332 {offsets = [0, 96], sizes = [8, 32], strides = [1, 1]} : vector<8x128xf32> to vector<8x32xf32>
    %338 = arith.mulf %335, %286 : vector<8x32xf32>
    %339 = arith.mulf %334, %336 : vector<8x32xf32>
    %340 = arith.addf %338, %339 : vector<8x32xf32>
    %341 = math.tanh %340 : vector<8x32xf32>
    %342 = arith.mulf %337, %341 : vector<8x32xf32>
    %343 = arith.select %318, %342, %285 : vector<8x32xf32>
    %344 = arith.select %318, %340, %286 : vector<8x32xf32>
    %c1_i32_114 = arith.constant 1 : i32
    %345 = arith.subi %c5_i32, %c1_i32_114 : i32
    %c0_i32_115 = arith.constant 0 : i32
    %346 = arith.cmpi sge, %345, %c0_i32_115 : i32
    %c8_i32_116 = arith.constant 8 : i32
    %347 = arith.cmpi slt, %345, %c8_i32_116 : i32
    %348 = arith.andi %346, %347 : i1
    %349 = arith.truncf %285 : vector<8x32xf32> to vector<8x32xbf16>
    %cst_117 = arith.constant dense<0.000000e+00> : vector<8x128xf32>
    %350 = tpu.matmul %349, %3, %cst_117 {dimension_numbers = #tpu.dot_dimension_numbers<[1], [0], [0], [1], [0, 0, 1, 1], [], []>} : vector<8x32xbf16>, vector<32x128xbf16>, vector<8x128xf32> -> vector<8x128xf32>
    %351 = vector.broadcast %11 : vector<1x128xf32> to vector<8x128xf32>
    %352 = arith.addf %351, %350 : vector<8x128xf32>
    %353 = arith.truncf %313 : vector<8x32xf32> to vector<8x32xbf16>
    %cst_118 = arith.constant dense<0.000000e+00> : vector<8x128xf32>
    %354 = tpu.matmul %353, %7, %cst_118 {dimension_numbers = #tpu.dot_dimension_numbers<[1], [0], [0], [1], [0, 0, 1, 1], [], []>} : vector<8x32xbf16>, vector<32x128xbf16>, vector<8x128xf32> -> vector<8x128xf32>
    %355 = arith.addf %352, %354 : vector<8x128xf32>
    %356 = arith.negf %355 : vector<8x128xf32>
    %357 = math.exp %356 : vector<8x128xf32>
    %cst_119 = arith.constant 1.000000e+00 : f32
    %358 = vector.broadcast %cst_119 : f32 to vector<8x128xf32>
    %359 = arith.addf %358, %357 : vector<8x128xf32>
    %360 = arith.divf %358, %359 : vector<8x128xf32>
    %361 = math.tanh %355 : vector<8x128xf32>
    %362 = vector.extract_strided_slice %360 {offsets = [0, 0], sizes = [8, 32], strides = [1, 1]} : vector<8x128xf32> to vector<8x32xf32>
    %363 = vector.extract_strided_slice %360 {offsets = [0, 32], sizes = [8, 32], strides = [1, 1]} : vector<8x128xf32> to vector<8x32xf32>
    %364 = vector.extract_strided_slice %361 {offsets = [0, 64], sizes = [8, 32], strides = [1, 1]} : vector<8x128xf32> to vector<8x32xf32>
    %365 = vector.extract_strided_slice %360 {offsets = [0, 96], sizes = [8, 32], strides = [1, 1]} : vector<8x128xf32> to vector<8x32xf32>
    %366 = arith.mulf %363, %314 : vector<8x32xf32>
    %367 = arith.mulf %362, %364 : vector<8x32xf32>
    %368 = arith.addf %366, %367 : vector<8x32xf32>
    %369 = math.tanh %368 : vector<8x32xf32>
    %370 = arith.mulf %365, %369 : vector<8x32xf32>
    %371 = arith.select %348, %370, %313 : vector<8x32xf32>
    %372 = arith.select %348, %368, %314 : vector<8x32xf32>
    %c6_i32 = arith.constant 6 : i32
    %c0_i32_120 = arith.constant 0 : i32
    %373 = arith.subi %c6_i32, %c0_i32_120 : i32
    %c0_i32_121 = arith.constant 0 : i32
    %374 = arith.cmpi sge, %373, %c0_i32_121 : i32
    %c8_i32_122 = arith.constant 8 : i32
    %375 = arith.cmpi slt, %373, %c8_i32_122 : i32
    %376 = arith.andi %374, %375 : i1
    %c0_i32_123 = arith.constant 0 : i32
    %c7_i32_124 = arith.constant 7 : i32
    %377 = arith.maxsi %c0_i32_123, %373 : i32
    %378 = arith.minsi %c7_i32_124, %377 : i32
    %c8_i32_125 = arith.constant 8 : i32
    %379 = arith.muli %378, %c8_i32_125 : i32
    %380 = tpu.assume_multiple %379, 8 : i32
    %381 = arith.index_cast %380 : i32 to index
    %c0_126 = arith.constant 0 : index
    %382 = vector.load %arg11[%381, %c0_126] : memref<64x128xf32, #tpu.memory_space<vmem>>, vector<8x128xf32>
    %383 = arith.truncf %343 : vector<8x32xf32> to vector<8x32xbf16>
    %cst_127 = arith.constant dense<0.000000e+00> : vector<8x128xf32>
    %384 = tpu.matmul %383, %5, %cst_127 {dimension_numbers = #tpu.dot_dimension_numbers<[1], [0], [0], [1], [0, 0, 1, 1], [], []>} : vector<8x32xbf16>, vector<32x128xbf16>, vector<8x128xf32> -> vector<8x128xf32>
    %385 = arith.addf %382, %384 : vector<8x128xf32>
    %386 = arith.negf %385 : vector<8x128xf32>
    %387 = math.exp %386 : vector<8x128xf32>
    %cst_128 = arith.constant 1.000000e+00 : f32
    %388 = vector.broadcast %cst_128 : f32 to vector<8x128xf32>
    %389 = arith.addf %388, %387 : vector<8x128xf32>
    %390 = arith.divf %388, %389 : vector<8x128xf32>
    %391 = math.tanh %385 : vector<8x128xf32>
    %392 = vector.extract_strided_slice %390 {offsets = [0, 0], sizes = [8, 32], strides = [1, 1]} : vector<8x128xf32> to vector<8x32xf32>
    %393 = vector.extract_strided_slice %390 {offsets = [0, 32], sizes = [8, 32], strides = [1, 1]} : vector<8x128xf32> to vector<8x32xf32>
    %394 = vector.extract_strided_slice %391 {offsets = [0, 64], sizes = [8, 32], strides = [1, 1]} : vector<8x128xf32> to vector<8x32xf32>
    %395 = vector.extract_strided_slice %390 {offsets = [0, 96], sizes = [8, 32], strides = [1, 1]} : vector<8x128xf32> to vector<8x32xf32>
    %396 = arith.mulf %393, %344 : vector<8x32xf32>
    %397 = arith.mulf %392, %394 : vector<8x32xf32>
    %398 = arith.addf %396, %397 : vector<8x32xf32>
    %399 = math.tanh %398 : vector<8x32xf32>
    %400 = arith.mulf %395, %399 : vector<8x32xf32>
    %401 = arith.select %376, %400, %343 : vector<8x32xf32>
    %402 = arith.select %376, %398, %344 : vector<8x32xf32>
    %c1_i32_129 = arith.constant 1 : i32
    %403 = arith.subi %c6_i32, %c1_i32_129 : i32
    %c0_i32_130 = arith.constant 0 : i32
    %404 = arith.cmpi sge, %403, %c0_i32_130 : i32
    %c8_i32_131 = arith.constant 8 : i32
    %405 = arith.cmpi slt, %403, %c8_i32_131 : i32
    %406 = arith.andi %404, %405 : i1
    %407 = arith.truncf %343 : vector<8x32xf32> to vector<8x32xbf16>
    %cst_132 = arith.constant dense<0.000000e+00> : vector<8x128xf32>
    %408 = tpu.matmul %407, %3, %cst_132 {dimension_numbers = #tpu.dot_dimension_numbers<[1], [0], [0], [1], [0, 0, 1, 1], [], []>} : vector<8x32xbf16>, vector<32x128xbf16>, vector<8x128xf32> -> vector<8x128xf32>
    %409 = vector.broadcast %11 : vector<1x128xf32> to vector<8x128xf32>
    %410 = arith.addf %409, %408 : vector<8x128xf32>
    %411 = arith.truncf %371 : vector<8x32xf32> to vector<8x32xbf16>
    %cst_133 = arith.constant dense<0.000000e+00> : vector<8x128xf32>
    %412 = tpu.matmul %411, %7, %cst_133 {dimension_numbers = #tpu.dot_dimension_numbers<[1], [0], [0], [1], [0, 0, 1, 1], [], []>} : vector<8x32xbf16>, vector<32x128xbf16>, vector<8x128xf32> -> vector<8x128xf32>
    %413 = arith.addf %410, %412 : vector<8x128xf32>
    %414 = arith.negf %413 : vector<8x128xf32>
    %415 = math.exp %414 : vector<8x128xf32>
    %cst_134 = arith.constant 1.000000e+00 : f32
    %416 = vector.broadcast %cst_134 : f32 to vector<8x128xf32>
    %417 = arith.addf %416, %415 : vector<8x128xf32>
    %418 = arith.divf %416, %417 : vector<8x128xf32>
    %419 = math.tanh %413 : vector<8x128xf32>
    %420 = vector.extract_strided_slice %418 {offsets = [0, 0], sizes = [8, 32], strides = [1, 1]} : vector<8x128xf32> to vector<8x32xf32>
    %421 = vector.extract_strided_slice %418 {offsets = [0, 32], sizes = [8, 32], strides = [1, 1]} : vector<8x128xf32> to vector<8x32xf32>
    %422 = vector.extract_strided_slice %419 {offsets = [0, 64], sizes = [8, 32], strides = [1, 1]} : vector<8x128xf32> to vector<8x32xf32>
    %423 = vector.extract_strided_slice %418 {offsets = [0, 96], sizes = [8, 32], strides = [1, 1]} : vector<8x128xf32> to vector<8x32xf32>
    %424 = arith.mulf %421, %372 : vector<8x32xf32>
    %425 = arith.mulf %420, %422 : vector<8x32xf32>
    %426 = arith.addf %424, %425 : vector<8x32xf32>
    %427 = math.tanh %426 : vector<8x32xf32>
    %428 = arith.mulf %423, %427 : vector<8x32xf32>
    %429 = arith.select %406, %428, %371 : vector<8x32xf32>
    %430 = arith.select %406, %426, %372 : vector<8x32xf32>
    %c7_i32_135 = arith.constant 7 : i32
    %c0_i32_136 = arith.constant 0 : i32
    %431 = arith.subi %c7_i32_135, %c0_i32_136 : i32
    %c0_i32_137 = arith.constant 0 : i32
    %432 = arith.cmpi sge, %431, %c0_i32_137 : i32
    %c8_i32_138 = arith.constant 8 : i32
    %433 = arith.cmpi slt, %431, %c8_i32_138 : i32
    %434 = arith.andi %432, %433 : i1
    %c0_i32_139 = arith.constant 0 : i32
    %c7_i32_140 = arith.constant 7 : i32
    %435 = arith.maxsi %c0_i32_139, %431 : i32
    %436 = arith.minsi %c7_i32_140, %435 : i32
    %c8_i32_141 = arith.constant 8 : i32
    %437 = arith.muli %436, %c8_i32_141 : i32
    %438 = tpu.assume_multiple %437, 8 : i32
    %439 = arith.index_cast %438 : i32 to index
    %c0_142 = arith.constant 0 : index
    %440 = vector.load %arg11[%439, %c0_142] : memref<64x128xf32, #tpu.memory_space<vmem>>, vector<8x128xf32>
    %441 = arith.truncf %401 : vector<8x32xf32> to vector<8x32xbf16>
    %cst_143 = arith.constant dense<0.000000e+00> : vector<8x128xf32>
    %442 = tpu.matmul %441, %5, %cst_143 {dimension_numbers = #tpu.dot_dimension_numbers<[1], [0], [0], [1], [0, 0, 1, 1], [], []>} : vector<8x32xbf16>, vector<32x128xbf16>, vector<8x128xf32> -> vector<8x128xf32>
    %443 = arith.addf %440, %442 : vector<8x128xf32>
    %444 = arith.negf %443 : vector<8x128xf32>
    %445 = math.exp %444 : vector<8x128xf32>
    %cst_144 = arith.constant 1.000000e+00 : f32
    %446 = vector.broadcast %cst_144 : f32 to vector<8x128xf32>
    %447 = arith.addf %446, %445 : vector<8x128xf32>
    %448 = arith.divf %446, %447 : vector<8x128xf32>
    %449 = math.tanh %443 : vector<8x128xf32>
    %450 = vector.extract_strided_slice %448 {offsets = [0, 0], sizes = [8, 32], strides = [1, 1]} : vector<8x128xf32> to vector<8x32xf32>
    %451 = vector.extract_strided_slice %448 {offsets = [0, 32], sizes = [8, 32], strides = [1, 1]} : vector<8x128xf32> to vector<8x32xf32>
    %452 = vector.extract_strided_slice %449 {offsets = [0, 64], sizes = [8, 32], strides = [1, 1]} : vector<8x128xf32> to vector<8x32xf32>
    %453 = vector.extract_strided_slice %448 {offsets = [0, 96], sizes = [8, 32], strides = [1, 1]} : vector<8x128xf32> to vector<8x32xf32>
    %454 = arith.mulf %451, %402 : vector<8x32xf32>
    %455 = arith.mulf %450, %452 : vector<8x32xf32>
    %456 = arith.addf %454, %455 : vector<8x32xf32>
    %457 = math.tanh %456 : vector<8x32xf32>
    %458 = arith.mulf %453, %457 : vector<8x32xf32>
    %459 = arith.select %434, %458, %401 : vector<8x32xf32>
    %460 = arith.select %434, %456, %402 : vector<8x32xf32>
    %c1_i32_145 = arith.constant 1 : i32
    %461 = arith.subi %c7_i32_135, %c1_i32_145 : i32
    %c0_i32_146 = arith.constant 0 : i32
    %462 = arith.cmpi sge, %461, %c0_i32_146 : i32
    %c8_i32_147 = arith.constant 8 : i32
    %463 = arith.cmpi slt, %461, %c8_i32_147 : i32
    %464 = arith.andi %462, %463 : i1
    %465 = arith.truncf %401 : vector<8x32xf32> to vector<8x32xbf16>
    %cst_148 = arith.constant dense<0.000000e+00> : vector<8x128xf32>
    %466 = tpu.matmul %465, %3, %cst_148 {dimension_numbers = #tpu.dot_dimension_numbers<[1], [0], [0], [1], [0, 0, 1, 1], [], []>} : vector<8x32xbf16>, vector<32x128xbf16>, vector<8x128xf32> -> vector<8x128xf32>
    %467 = vector.broadcast %11 : vector<1x128xf32> to vector<8x128xf32>
    %468 = arith.addf %467, %466 : vector<8x128xf32>
    %469 = arith.truncf %429 : vector<8x32xf32> to vector<8x32xbf16>
    %cst_149 = arith.constant dense<0.000000e+00> : vector<8x128xf32>
    %470 = tpu.matmul %469, %7, %cst_149 {dimension_numbers = #tpu.dot_dimension_numbers<[1], [0], [0], [1], [0, 0, 1, 1], [], []>} : vector<8x32xbf16>, vector<32x128xbf16>, vector<8x128xf32> -> vector<8x128xf32>
    %471 = arith.addf %468, %470 : vector<8x128xf32>
    %472 = arith.negf %471 : vector<8x128xf32>
    %473 = math.exp %472 : vector<8x128xf32>
    %cst_150 = arith.constant 1.000000e+00 : f32
    %474 = vector.broadcast %cst_150 : f32 to vector<8x128xf32>
    %475 = arith.addf %474, %473 : vector<8x128xf32>
    %476 = arith.divf %474, %475 : vector<8x128xf32>
    %477 = math.tanh %471 : vector<8x128xf32>
    %478 = vector.extract_strided_slice %476 {offsets = [0, 0], sizes = [8, 32], strides = [1, 1]} : vector<8x128xf32> to vector<8x32xf32>
    %479 = vector.extract_strided_slice %476 {offsets = [0, 32], sizes = [8, 32], strides = [1, 1]} : vector<8x128xf32> to vector<8x32xf32>
    %480 = vector.extract_strided_slice %477 {offsets = [0, 64], sizes = [8, 32], strides = [1, 1]} : vector<8x128xf32> to vector<8x32xf32>
    %481 = vector.extract_strided_slice %476 {offsets = [0, 96], sizes = [8, 32], strides = [1, 1]} : vector<8x128xf32> to vector<8x32xf32>
    %482 = arith.mulf %479, %430 : vector<8x32xf32>
    %483 = arith.mulf %478, %480 : vector<8x32xf32>
    %484 = arith.addf %482, %483 : vector<8x32xf32>
    %485 = math.tanh %484 : vector<8x32xf32>
    %486 = arith.mulf %481, %485 : vector<8x32xf32>
    %487 = arith.select %464, %486, %429 : vector<8x32xf32>
    %488 = arith.select %464, %484, %430 : vector<8x32xf32>
    %c8_i32_151 = arith.constant 8 : i32
    %c0_i32_152 = arith.constant 0 : i32
    %489 = arith.subi %c8_i32_151, %c0_i32_152 : i32
    %c0_i32_153 = arith.constant 0 : i32
    %490 = arith.cmpi sge, %489, %c0_i32_153 : i32
    %c8_i32_154 = arith.constant 8 : i32
    %491 = arith.cmpi slt, %489, %c8_i32_154 : i32
    %492 = arith.andi %490, %491 : i1
    %c0_i32_155 = arith.constant 0 : i32
    %c7_i32_156 = arith.constant 7 : i32
    %493 = arith.maxsi %c0_i32_155, %489 : i32
    %494 = arith.minsi %c7_i32_156, %493 : i32
    %c8_i32_157 = arith.constant 8 : i32
    %495 = arith.muli %494, %c8_i32_157 : i32
    %496 = tpu.assume_multiple %495, 8 : i32
    %497 = arith.index_cast %496 : i32 to index
    %c0_158 = arith.constant 0 : index
    %498 = vector.load %arg11[%497, %c0_158] : memref<64x128xf32, #tpu.memory_space<vmem>>, vector<8x128xf32>
    %499 = arith.truncf %459 : vector<8x32xf32> to vector<8x32xbf16>
    %cst_159 = arith.constant dense<0.000000e+00> : vector<8x128xf32>
    %500 = tpu.matmul %499, %5, %cst_159 {dimension_numbers = #tpu.dot_dimension_numbers<[1], [0], [0], [1], [0, 0, 1, 1], [], []>} : vector<8x32xbf16>, vector<32x128xbf16>, vector<8x128xf32> -> vector<8x128xf32>
    %501 = arith.addf %498, %500 : vector<8x128xf32>
    %502 = arith.negf %501 : vector<8x128xf32>
    %503 = math.exp %502 : vector<8x128xf32>
    %cst_160 = arith.constant 1.000000e+00 : f32
    %504 = vector.broadcast %cst_160 : f32 to vector<8x128xf32>
    %505 = arith.addf %504, %503 : vector<8x128xf32>
    %506 = arith.divf %504, %505 : vector<8x128xf32>
    %507 = math.tanh %501 : vector<8x128xf32>
    %508 = vector.extract_strided_slice %506 {offsets = [0, 0], sizes = [8, 32], strides = [1, 1]} : vector<8x128xf32> to vector<8x32xf32>
    %509 = vector.extract_strided_slice %506 {offsets = [0, 32], sizes = [8, 32], strides = [1, 1]} : vector<8x128xf32> to vector<8x32xf32>
    %510 = vector.extract_strided_slice %507 {offsets = [0, 64], sizes = [8, 32], strides = [1, 1]} : vector<8x128xf32> to vector<8x32xf32>
    %511 = vector.extract_strided_slice %506 {offsets = [0, 96], sizes = [8, 32], strides = [1, 1]} : vector<8x128xf32> to vector<8x32xf32>
    %512 = arith.mulf %509, %460 : vector<8x32xf32>
    %513 = arith.mulf %508, %510 : vector<8x32xf32>
    %514 = arith.addf %512, %513 : vector<8x32xf32>
    %515 = math.tanh %514 : vector<8x32xf32>
    %516 = arith.mulf %511, %515 : vector<8x32xf32>
    %517 = arith.select %492, %516, %459 : vector<8x32xf32>
    %518 = arith.select %492, %514, %460 : vector<8x32xf32>
    %c1_i32_161 = arith.constant 1 : i32
    %519 = arith.subi %c8_i32_151, %c1_i32_161 : i32
    %c0_i32_162 = arith.constant 0 : i32
    %520 = arith.cmpi sge, %519, %c0_i32_162 : i32
    %c8_i32_163 = arith.constant 8 : i32
    %521 = arith.cmpi slt, %519, %c8_i32_163 : i32
    %522 = arith.andi %520, %521 : i1
    %523 = arith.truncf %459 : vector<8x32xf32> to vector<8x32xbf16>
    %cst_164 = arith.constant dense<0.000000e+00> : vector<8x128xf32>
    %524 = tpu.matmul %523, %3, %cst_164 {dimension_numbers = #tpu.dot_dimension_numbers<[1], [0], [0], [1], [0, 0, 1, 1], [], []>} : vector<8x32xbf16>, vector<32x128xbf16>, vector<8x128xf32> -> vector<8x128xf32>
    %525 = vector.broadcast %11 : vector<1x128xf32> to vector<8x128xf32>
    %526 = arith.addf %525, %524 : vector<8x128xf32>
    %527 = arith.truncf %487 : vector<8x32xf32> to vector<8x32xbf16>
    %cst_165 = arith.constant dense<0.000000e+00> : vector<8x128xf32>
    %528 = tpu.matmul %527, %7, %cst_165 {dimension_numbers = #tpu.dot_dimension_numbers<[1], [0], [0], [1], [0, 0, 1, 1], [], []>} : vector<8x32xbf16>, vector<32x128xbf16>, vector<8x128xf32> -> vector<8x128xf32>
    %529 = arith.addf %526, %528 : vector<8x128xf32>
    %530 = arith.negf %529 : vector<8x128xf32>
    %531 = math.exp %530 : vector<8x128xf32>
    %cst_166 = arith.constant 1.000000e+00 : f32
    %532 = vector.broadcast %cst_166 : f32 to vector<8x128xf32>
    %533 = arith.addf %532, %531 : vector<8x128xf32>
    %534 = arith.divf %532, %533 : vector<8x128xf32>
    %535 = math.tanh %529 : vector<8x128xf32>
    %536 = vector.extract_strided_slice %534 {offsets = [0, 0], sizes = [8, 32], strides = [1, 1]} : vector<8x128xf32> to vector<8x32xf32>
    %537 = vector.extract_strided_slice %534 {offsets = [0, 32], sizes = [8, 32], strides = [1, 1]} : vector<8x128xf32> to vector<8x32xf32>
    %538 = vector.extract_strided_slice %535 {offsets = [0, 64], sizes = [8, 32], strides = [1, 1]} : vector<8x128xf32> to vector<8x32xf32>
    %539 = vector.extract_strided_slice %534 {offsets = [0, 96], sizes = [8, 32], strides = [1, 1]} : vector<8x128xf32> to vector<8x32xf32>
    %540 = arith.mulf %537, %488 : vector<8x32xf32>
    %541 = arith.mulf %536, %538 : vector<8x32xf32>
    %542 = arith.addf %540, %541 : vector<8x32xf32>
    %543 = math.tanh %542 : vector<8x32xf32>
    %544 = arith.mulf %539, %543 : vector<8x32xf32>
    %545 = arith.select %522, %544, %487 : vector<8x32xf32>
    %546 = arith.select %522, %542, %488 : vector<8x32xf32>
    %c9_i32 = arith.constant 9 : i32
    %c0_167 = arith.constant 0 : index
    %c0_168 = arith.constant 0 : index
    %c0_169 = arith.constant 0 : index
    %547 = vector.load %arg9[%c0_167, %c0_168, %c0_169] : memref<2x8x32xf32, #tpu.memory_space<vmem>>, vector<1x8x32xf32>
    %548 = vector.shape_cast %547 : vector<1x8x32xf32> to vector<8x32xf32>
    %549 = vector.shape_cast %517 : vector<8x32xf32> to vector<1x8x32xf32>
    tpu.vector_store %arg9[%c0_167, %c0_168, %c0_169], %549 {strides = array<i32>} : memref<2x8x32xf32, #tpu.memory_space<vmem>>, vector<1x8x32xf32>,
    %c0_170 = arith.constant 0 : index
    %c0_171 = arith.constant 0 : index
    %c0_172 = arith.constant 0 : index
    %550 = vector.load %arg10[%c0_170, %c0_171, %c0_172] : memref<2x8x32xf32, #tpu.memory_space<vmem>>, vector<1x8x32xf32>
    %551 = vector.shape_cast %550 : vector<1x8x32xf32> to vector<8x32xf32>
    %552 = vector.shape_cast %518 : vector<8x32xf32> to vector<1x8x32xf32>
    tpu.vector_store %arg10[%c0_170, %c0_171, %c0_172], %552 {strides = array<i32>} : memref<2x8x32xf32, #tpu.memory_space<vmem>>, vector<1x8x32xf32>,
    %c1_173 = arith.constant 1 : index
    %c0_174 = arith.constant 0 : index
    %c0_175 = arith.constant 0 : index
    %553 = vector.load %arg9[%c1_173, %c0_174, %c0_175] : memref<2x8x32xf32, #tpu.memory_space<vmem>>, vector<1x8x32xf32>
    %554 = vector.shape_cast %553 : vector<1x8x32xf32> to vector<8x32xf32>
    %555 = vector.shape_cast %545 : vector<8x32xf32> to vector<1x8x32xf32>
    tpu.vector_store %arg9[%c1_173, %c0_174, %c0_175], %555 {strides = array<i32>} : memref<2x8x32xf32, #tpu.memory_space<vmem>>, vector<1x8x32xf32>,
    %c1_176 = arith.constant 1 : index
    %c0_177 = arith.constant 0 : index
    %c0_178 = arith.constant 0 : index
    %556 = vector.load %arg10[%c1_176, %c0_177, %c0_178] : memref<2x8x32xf32, #tpu.memory_space<vmem>>, vector<1x8x32xf32>
    %557 = vector.shape_cast %556 : vector<1x8x32xf32> to vector<8x32xf32>
    %558 = vector.shape_cast %546 : vector<8x32xf32> to vector<1x8x32xf32>
    tpu.vector_store %arg10[%c1_176, %c0_177, %c0_178], %558 {strides = array<i32>} : memref<2x8x32xf32, #tpu.memory_space<vmem>>, vector<1x8x32xf32>,
    %c0_179 = arith.constant 0 : index
    %c0_180 = arith.constant 0 : index
    %559 = vector.load %arg6[%c0_179, %c0_180] : memref<32x1xf32, #tpu.memory_space<vmem>>, vector<32x1xf32>
    %cst_181 = arith.constant dense<0.000000e+00> : vector<8x1xf32>
    %560 = tpu.matmul %545, %559, %cst_181 {dimension_numbers = #tpu.dot_dimension_numbers<[1], [0], [0], [1], [0, 0, 1, 1], [], []>} : vector<8x32xf32>, vector<32x1xf32>, vector<8x1xf32> -> vector<8x1xf32>
    %c0_182 = arith.constant 0 : index
    %c0_183 = arith.constant 0 : index
    %561 = vector.load %arg7[%c0_182, %c0_183] : memref<1x1xf32, #tpu.memory_space<vmem>>, vector<1x1xf32>
    %562 = vector.broadcast %561 : vector<1x1xf32> to vector<8x1xf32>
    %563 = arith.addf %560, %562 : vector<8x1xf32>
    %564 = arith.negf %563 : vector<8x1xf32>
    %565 = math.exp %564 : vector<8x1xf32>
    %cst_184 = arith.constant 1.000000e+00 : f32
    %566 = vector.broadcast %cst_184 : f32 to vector<8x1xf32>
    %567 = arith.addf %566, %565 : vector<8x1xf32>
    %568 = arith.divf %566, %567 : vector<8x1xf32>
    %c0_185 = arith.constant 0 : index
    %c0_186 = arith.constant 0 : index
    %569 = vector.load %arg8[%c0_185, %c0_186] : memref<8x1xf32, #tpu.memory_space<vmem>>, vector<8x1xf32>
    tpu.vector_store %arg8[%c0_185, %c0_186], %568 {strides = array<i32>} : memref<8x1xf32, #tpu.memory_space<vmem>>, vector<8x1xf32>,
    return
  }
}

</mosaic_0001>

<llo_original>
// kernel: tpu_custom_call.1
$region0: #{tpu_custom_call.1}
  #allocation0 [shape = 'u32[]', space=smem, size = 0x4, offset = 0x4, fixed_abs, tag = 'smem constant byte address 0x4 - core index']
  #allocation1 [shape = 'u32[144,128]{1,0:T(1,128)}', space=vmem, size = 0x12000, scoped, tag = 'internal scratch']
  #allocation2 [shape = 'f32[64,128]{1,0:T(8,128)}', space=vmem, size = 0x8000, scoped, tag = 'scratch operand']
  #allocation3 [shape = 'f32[1,1]{1,0:T(1,128)S(1)}', space=vmem, size = 0x200, scoped, tag = 'scoped memory for tpu_custom_call.1']
  %s0 = inlined_call_operand.vmem [shape: bf16[64,32], index: 0, kind: input, shape index: {}]
  %s1 = inlined_call_operand.vmem [shape: f32[2,8,32], index: 1, kind: input, shape index: {}]
  %s2 = inlined_call_operand.hbm [shape: f32[2,8,32], index: 2, kind: input, shape index: {}]
  %s3 = inlined_call_operand.vmem [shape: bf16[2,32,128], index: 3, kind: input, shape index: {}]
  %s4 = inlined_call_operand.vmem [shape: bf16[2,32,128], index: 4, kind: input, shape index: {}]
  %s5 = inlined_call_operand.vmem [shape: f32[2,1,128], index: 5, kind: input, shape index: {}]
  %s6 = inlined_call_operand.vmem [shape: f32[32,1], index: 6, kind: input, shape index: {}]
  %s7 = inlined_call_operand.<no memory space> [shape: f32[1,1], index: 7, kind: input, shape index: {}]
  %s8 = inlined_call_operand.vmem [shape: f32[8,1], index: 8, kind: output, shape index: {0}]
  %s9 = inlined_call_operand.hbm [shape: f32[2,8,32], index: 9, kind: output, shape index: {1}]
  %s10 = inlined_call_operand.hbm [shape: f32[2,8,32], index: 10, kind: output, shape index: {2}]
  %11 = xla_tuple %s8, %s9, %s10
  %s12 = sld [smem:[#allocation0]]
  $region62: #{tpu_custom_call.1} parent=0
    _
  %s14 = ssub.s32 1, %s12
  %s15 = scalar_select 0, %s14, %s12
  %v16 = vstv %s7
  %17 = vst [vmem:[#allocation3] sm:$0x1] %v16
  $region1: #{tpu_custom_call.1} parent=0
    #allocation4 [shape = 'u8[8192]{0}', space=vmem, size = 0x2000, scoped, tag = 'input window, operand 2, single buffered']
    #allocation5 [shape = 's32[1]{0}', space=sflag, size = 0x4, scoped, tag = 'scoped memory for tpu_custom_call.1']
    #allocation6 [shape = 's32[1]{0}', space=sflag, size = 0x4, scoped, tag = 'scoped memory for tpu_custom_call.1']
    #allocation7 [shape = 'u8[8192]{0}', space=vmem, size = 0x2000, scoped, tag = 'output window, operand 1, single buffered']
    #allocation8 [shape = 'u8[8192]{0}', space=vmem, size = 0x2000, scoped, tag = 'output window, operand 2, single buffered']
    #allocation9 [shape = 's32[1]{0}', space=sflag, size = 0x4, scoped, tag = 'scoped memory for tpu_custom_call.1']
    %18 = vsyncpa [#allocation5], 0
    %19 = vsyncpa [#allocation6], 0
    %20 = vsyncpa [#allocation9], 0
    // Predicated region
    $region2: #{tpu_custom_call.1} parent=1 // pred_check
      _
    $region3: #{tpu_custom_call.1} parent=1 // pred_check_branch
      %22 = sbr.rel (0) target = $region5
    $region4: #{tpu_custom_call.1} parent=1 // pred_region
      _
    $region5: #{tpu_custom_call.1} parent=1 // pred_fallthru
      _
    // Predicated region
    $region6: #{tpu_custom_call.1} parent=1 // pred_check
      _
    $region7: #{tpu_custom_call.1} parent=1 // pred_check_branch
      %24 = sbr.rel (0) target = $region9
    $region8: #{tpu_custom_call.1} parent=1 // pred_region
      _
    $region9: #{tpu_custom_call.1} parent=1 // pred_fallthru
      _
    // Predicated region
    $region10: #{tpu_custom_call.1} parent=1 // pred_check
      _
    $region11: #{tpu_custom_call.1} parent=1 // pred_check_branch
      %26 = sbr.rel (0) target = $region13
    $region12: #{tpu_custom_call.1} parent=1 // pred_region
      %s28 = ssub.s32 256, 256
      %29 = vsyncadd [#allocation5], %s28
      %s30 = sshll.u32 [#allocation4], 4
      %s31 = int_to_ptr.vmem [resolvable:$true] %s30
      %36 = dma.hbm_to_vmem [thread:$0]  %s2, 256, %s31, [#allocation5], 128, 128, 8
    $region13: #{tpu_custom_call.1} parent=1 // pred_fallthru
      _
    // Predicated region
    $region14: #{tpu_custom_call.1} parent=1 // pred_check
      _
    $region15: #{tpu_custom_call.1} parent=1 // pred_check_branch
      %38 = sbr.rel (0) target = $region17
    $region16: #{tpu_custom_call.1} parent=1 // pred_region
      _
    $region17: #{tpu_custom_call.1} parent=1 // pred_fallthru
      _
    // Predicated region
    $region18: #{tpu_custom_call.1} parent=1 // pred_check
      _
    $region19: #{tpu_custom_call.1} parent=1 // pred_check_branch
      %40 = sbr.rel (0) target = $region21
    $region20: #{tpu_custom_call.1} parent=1 // pred_region
      _
    $region21: #{tpu_custom_call.1} parent=1 // pred_fallthru
      _
    // Predicated region
    $region22: #{tpu_custom_call.1} parent=1 // pred_check
      _
    $region23: #{tpu_custom_call.1} parent=1 // pred_check_branch
      %42 = sbr.rel (0) target = $region25
    $region24: #{tpu_custom_call.1} parent=1 // pred_region
      _
    $region25: #{tpu_custom_call.1} parent=1 // pred_fallthru
      _
    // Predicated region
    $region26: #{tpu_custom_call.1} parent=1 // pred_check
      _
    $region27: #{tpu_custom_call.1} parent=1 // pred_check_branch
      %44 = sbr.rel (0) target = $region29
    $region28: #{tpu_custom_call.1} parent=1 // pred_region
      _
    $region29: #{tpu_custom_call.1} parent=1 // pred_fallthru
      _
    // Predicated region
    $region30: #{tpu_custom_call.1} parent=1 // pred_check
      _
    $region31: #{tpu_custom_call.1} parent=1 // pred_check_branch
      %46 = sbr.rel (0) target = $region33
    $region32: #{tpu_custom_call.1} parent=1 // pred_region
      _
    $region33: #{tpu_custom_call.1} parent=1 // pred_fallthru
      _
    // Predicated region
    $region34: #{tpu_custom_call.1} parent=1 // pred_check
      _
    $region35: #{tpu_custom_call.1} parent=1 // pred_check_branch
      %48 = sbr.rel (0) target = $region37
    $region36: #{tpu_custom_call.1} parent=1 // pred_region
      %49 = dma.done [#allocation5], 256
    $region37: #{tpu_custom_call.1} parent=1 // pred_fallthru
      _
    %v51 = vld [vmem:[%s3] sm:$0xf]
    %v52 = vld [vmem:[%s3 + $0x4] sm:$0xf]
    %v53 = vld [vmem:[%s3 + $0x8] sm:$0xf]
    %v54 = vld [vmem:[%s3 + $0xc] sm:$0xf]
    %s55 = scalar_lea.vmem %s3, 16
    %v56 = vld [vmem:[%s55] sm:$0xf]
    %v57 = vld [vmem:[%s55 + $0x4] sm:$0xf]
    %v58 = vld [vmem:[%s55 + $0x8] sm:$0xf]
    %v59 = vld [vmem:[%s55 + $0xc] sm:$0xf]
    %v60 = vld [vmem:[%s4] sm:$0xf]
    %v61 = vld [vmem:[%s4 + $0x4] sm:$0xf]
    %v62 = vld [vmem:[%s4 + $0x8] sm:$0xf]
    %v63 = vld [vmem:[%s4 + $0xc] sm:$0xf]
    %s64 = scalar_lea.vmem %s4, 16
    %v65 = vld [vmem:[%s64] sm:$0xf]
    %v66 = vld [vmem:[%s64 + $0x4] sm:$0xf]
    %v67 = vld [vmem:[%s64 + $0x8] sm:$0xf]
    %v68 = vld [vmem:[%s64 + $0xc] sm:$0xf]
    %v69 = vld [vmem:[%s5] sm:$0x1]
    %s70 = scalar_lea.vmem %s5, 1
    %v71 = vld [vmem:[%s70] sm:$0x1]
    %v72 = vld [vmem:[%s0] sm:$0xf]
    %v73 = vld [vmem:[%s0 + $0x4] sm:$0xf]
    %v74 = vld [vmem:[%s0 + $0x8] sm:$0xf]
    %v75 = vld [vmem:[%s0 + $0xc] sm:$0xf]
    %v76 = vld [vmem:[%s0 + $0x10] sm:$0xf]
    %v77 = vld [vmem:[%s0 + $0x14] sm:$0xf]
    %v78 = vld [vmem:[%s0 + $0x18] sm:$0xf]
    %v79 = vld [vmem:[%s0 + $0x1c] sm:$0xf]
    %v81 = vlaneseq
    %v82 = vshrl.u32 %v81, 7
    %v83 = vsub.s32 0, %v82
    %v84 = vrot.slane %v69, %v83
    %v94 = vunpack.c.l.b16 %v72
    %v95 = vunpack.c.l.b16 %v73
    %v96 = vunpack.c.l.b16 %v74
    %v97 = vunpack.c.l.b16 %v75
    %v98 = vunpack.c.l.b16 %v76
    %v99 = vunpack.c.l.b16 %v77
    %v100 = vunpack.c.l.b16 %v78
    %v101 = vunpack.c.l.b16 %v79
    %v102 = vpack.c.b16 %v95, %v94
    %v103 = vpack.c.b16 %v97, %v96
    %v104 = vpack.c.b16 %v99, %v98
    %v105 = vpack.c.b16 %v101, %v100
    %v110 = vunpack.c.l.b16 %v51
    %v111 = vunpack.c.l.b16 %v52
    %v112 = vunpack.c.l.b16 %v53
    %v113 = vunpack.c.l.b16 %v54
    %v114 = vpack.c.b16 %v111, %v110
    %v115 = vpack.c.b16 %v113, %v112
    %vm118 = vcmask 261120
    %v120 = vsel %vm118, %v102, 0
    %v123 = vsel %vm118, %v103, 0
    %v126 = vsel %vm118, %v104, 0
    %v129 = vsel %vm118, %v105, 0
    %131 = vmatprep.subr.bf16.mxu0 0
    %132 = vmatpush1.bf16.msra.mxu0 %v114
    %133 = vmatprep.subr.bf16.mxu0 0
    %134 = vmatpush1.bf16.msra.mxu0 %v115
    %135 = vmatprep.subr.bf16.mxu0 0
    %136 = vmatpush1.bf16.msra.mxu0 0
    %137 = vmatprep.subr.bf16.mxu0 0
    %138 = vmatpush1.bf16.msra.mxu0 0
    %139 = vmatprep.subr.bf16.mxu0 0
    %140 = vmatpush1.bf16.msra.mxu0 0
    %141 = vmatprep.subr.bf16.mxu0 0
    %142 = vmatpush1.bf16.msra.mxu0 0
    %143 = vmatprep.subr.bf16.mxu0 0
    %144 = vmatpush1.bf16.msra.mxu0 0
    %145 = vmatprep.subr.bf16.mxu0 0
    %146 = vmatpush1.bf16.msra.mxu0 0
    %147 = vmatprep.subr.bf16.mxu0 0
    %148 = vmatpush1.bf16.msra.mxu0 0
    %149 = vmatprep.subr.bf16.mxu0 0
    %150 = vmatpush1.bf16.msra.mxu0 0
    %151 = vmatprep.subr.bf16.mxu0 0
    %152 = vmatpush1.bf16.msra.mxu0 0
    %153 = vmatprep.subr.bf16.mxu0 0
    %154 = vmatpush1.bf16.msra.mxu0 0
    %155 = vmatprep.subr.bf16.mxu0 0
    %156 = vmatpush1.bf16.msra.mxu0 0
    %157 = vmatprep.subr.bf16.mxu0 0
    %158 = vmatpush1.bf16.msra.mxu0 0
    %159 = vmatprep.subr.bf16.mxu0 0
    %160 = vmatpush1.bf16.msra.mxu0 0
    %161 = vmatprep.subr.bf16.mxu0 0
    %162 = vmatpush1.bf16.msra.mxu0 0
    %163 = vmatprep.mubr.bf16.mxu0 0
    %164 = vmatmul.mubr.bf16.gmra.mrb[0].mxu0 %v120
    %v165 = vpop.f32.mrb[0].mxu0
    %v166 = vadd.f32 %v84, %v165
    %v167 = vpop.f32.mrb[0].mxu0
    %v168 = vpop.f32.mrb[0].mxu0
    %v169 = vadd.f32 %v84, %v168
    %v170 = vpop.f32.mrb[0].mxu0
    %171 = vmatprep.mubr.bf16.mxu0 0
    %172 = vmatmul.mubr.bf16.gmra.mrb[0].mxu0 %v123
    %v173 = vpop.f32.mrb[0].mxu0
    %v174 = vadd.f32 %v84, %v173
    %v175 = vpop.f32.mrb[0].mxu0
    %v176 = vpop.f32.mrb[0].mxu0
    %v177 = vadd.f32 %v84, %v176
    %v178 = vpop.f32.mrb[0].mxu0
    %179 = vmatprep.mubr.bf16.mxu0 0
    %180 = vmatmul.mubr.bf16.gmra.mrb[0].mxu0 %v126
    %v181 = vpop.f32.mrb[0].mxu0
    %v182 = vadd.f32 %v84, %v181
    %v183 = vpop.f32.mrb[0].mxu0
    %v184 = vpop.f32.mrb[0].mxu0
    %v185 = vadd.f32 %v84, %v184
    %v186 = vpop.f32.mrb[0].mxu0
    %187 = vmatprep.mubr.bf16.mxu0 0
    %188 = vmatmul.mubr.bf16.gmra.mrb[0].mxu0 %v129
    %v189 = vpop.f32.mrb[0].mxu0
    %v190 = vadd.f32 %v84, %v189
    %v191 = vpop.f32.mrb[0].mxu0
    %v192 = vpop.f32.mrb[0].mxu0
    %v193 = vadd.f32 %v84, %v192
    %v194 = vpop.f32.mrb[0].mxu0
    %195 = vdwg.mxu0
    %196 = vst [vmem:[#allocation2] sm:$0xff] %v166
    %197 = vst [vmem:[#allocation2 + $0x8] sm:$0xff] %v169
    %198 = vst [vmem:[#allocation2 + $0x10] sm:$0xff] %v174
    %199 = vst [vmem:[#allocation2 + $0x18] sm:$0xff] %v177
    %200 = vst [vmem:[#allocation2 + $0x20] sm:$0xff] %v182
    %201 = vst [vmem:[#allocation2 + $0x28] sm:$0xff] %v185
    %202 = vst [vmem:[#allocation2 + $0x30] sm:$0xff] %v190
    %203 = vst [vmem:[#allocation2 + $0x38] sm:$0xff] %v193
    %v204 = vld [vmem:[%s1] sm:$0xff]
    %s205 = scalar_lea.vmem %s1, 8
    %v206 = vld [vmem:[%s205] sm:$0xff]
    %v207 = vld [vmem:[#allocation4] sm:$0xff]
    %s208 = scalar_lea.vmem [#allocation4], 8
    %v209 = vld [vmem:[%s208] sm:$0xff]
    %v210 = vld [vmem:[#allocation2] sm:$0xff]
    %v211 = vpack.c.bf16 %v204, %v204
    %v216 = vunpack.c.l.b16 %v60
    %v217 = vunpack.c.l.b16 %v61
    %v218 = vunpack.c.l.b16 %v62
    %v219 = vunpack.c.l.b16 %v63
    %v220 = vpack.c.b16 %v217, %v216
    %v221 = vpack.c.b16 %v219, %v218
    %v225 = vsel %vm118, %v211, 0
    %227 = vmatprep.subr.bf16.mxu0 0
    %228 = vmatpush1.bf16.msra.mxu0 %v220
    %229 = vmatprep.subr.bf16.mxu0 0
    %230 = vmatpush1.bf16.msra.mxu0 %v221
    %231 = vmatprep.subr.bf16.mxu0 0
    %232 = vmatpush1.bf16.msra.mxu0 0
    %233 = vmatprep.subr.bf16.mxu0 0
    %234 = vmatpush1.bf16.msra.mxu0 0
    %235 = vmatprep.subr.bf16.mxu0 0
    %236 = vmatpush1.bf16.msra.mxu0 0
    %237 = vmatprep.subr.bf16.mxu0 0
    %238 = vmatpush1.bf16.msra.mxu0 0
    %239 = vmatprep.subr.bf16.mxu0 0
    %240 = vmatpush1.bf16.msra.mxu0 0
    %241 = vmatprep.subr.bf16.mxu0 0
    %242 = vmatpush1.bf16.msra.mxu0 0
    %243 = vmatprep.subr.bf16.mxu0 0
    %244 = vmatpush1.bf16.msra.mxu0 0
    %245 = vmatprep.subr.bf16.mxu0 0
    %246 = vmatpush1.bf16.msra.mxu0 0
    %247 = vmatprep.subr.bf16.mxu0 0
    %248 = vmatpush1.bf16.msra.mxu0 0
    %249 = vmatprep.subr.bf16.mxu0 0
    %250 = vmatpush1.bf16.msra.mxu0 0
    %251 = vmatprep.subr.bf16.mxu0 0
    %252 = vmatpush1.bf16.msra.mxu0 0
    %253 = vmatprep.subr.bf16.mxu0 0
    %254 = vmatpush1.bf16.msra.mxu0 0
    %255 = vmatprep.subr.bf16.mxu0 0
    %256 = vmatpush1.bf16.msra.mxu0 0
    %257 = vmatprep.subr.bf16.mxu0 0
    %258 = vmatpush1.bf16.msra.mxu0 0
    %259 = vmatprep.mubr.bf16.mxu0 0
    %260 = vmatmul.mubr.bf16.gmra.mrb[0].mxu0 %v225
    %v261 = vpop.f32.mrb[0].mxu0
    %v262 = vadd.f32 0.0, %v261
    %v263 = vpop.f32.mrb[0].mxu0
    %v264 = vpop.f32.mrb[0].mxu0
    %v265 = vpop.f32.mrb[0].mxu0
    %266 = vdwg.mxu0
    %v267 = vadd.f32 %v210, %v262
    %v268 = vxor.u32 %v267, 2147483648
    %v269 = vmul.f32 %v268, 1.442695
    %v270 = vpow.pop %v269
    %v271 = vadd.f32 %v270, 1.0
    %v272 = vrcp.pop %v271
    %v273 = vmul.f32 1.0, %v272
    %v274 = vtanh.pop %v267
    %276 = vrot.lane.b32.xlu0 %v207, 32
    %v277 = vpop.permute.xlu0 %276
    %v279 = vmul.f32 %v273, %v277
    %281 = vrot.lane.b32.xlu0 %v274, 64
    %v282 = vpop.permute.xlu0 %281
    %v284 = vmul.f32 %v273, %v282
    %286 = vrot.lane.b32.xlu0 %v284, 32
    %v287 = vpop.permute.xlu0 %286
    %v289 = vadd.f32 %v279, %v287
    %v290 = vtanh.pop %v289
    %292 = vrot.lane.b32.xlu0 %v290, 64
    %v293 = vpop.permute.xlu0 %292
    %v295 = vmul.f32 %v273, %v293
    %s296 = scalar_lea.vmem [#allocation2], 8
    %v297 = vld [vmem:[%s296] sm:$0xff]
    %v298 = vpack.c.bf16 %v295, %v295
    %300 = vrot.lane.b32.xlu0 %v298, 32
    %v301 = vpop.permute.xlu0 %300
    %v303 = vsel %vm118, %v301, 0
    %305 = vmatprep.subr.bf16.mxu0 0
    %306 = vmatpush1.bf16.msra.mxu0 %v220
    %307 = vmatprep.subr.bf16.mxu0 0
    %308 = vmatpush1.bf16.msra.mxu0 %v221
    %309 = vmatprep.subr.bf16.mxu0 0
    %310 = vmatpush1.bf16.msra.mxu0 0
    %311 = vmatprep.subr.bf16.mxu0 0
    %312 = vmatpush1.bf16.msra.mxu0 0
    %313 = vmatprep.subr.bf16.mxu0 0
    %314 = vmatpush1.bf16.msra.mxu0 0
    %315 = vmatprep.subr.bf16.mxu0 0
    %316 = vmatpush1.bf16.msra.mxu0 0
    %317 = vmatprep.subr.bf16.mxu0 0
    %318 = vmatpush1.bf16.msra.mxu0 0
    %319 = vmatprep.subr.bf16.mxu0 0
    %320 = vmatpush1.bf16.msra.mxu0 0
    %321 = vmatprep.subr.bf16.mxu0 0
    %322 = vmatpush1.bf16.msra.mxu0 0
    %323 = vmatprep.subr.bf16.mxu0 0
    %324 = vmatpush1.bf16.msra.mxu0 0
    %325 = vmatprep.subr.bf16.mxu0 0
    %326 = vmatpush1.bf16.msra.mxu0 0
    %327 = vmatprep.subr.bf16.mxu0 0
    %328 = vmatpush1.bf16.msra.mxu0 0
    %329 = vmatprep.subr.bf16.mxu0 0
    %330 = vmatpush1.bf16.msra.mxu0 0
    %331 = vmatprep.subr.bf16.mxu0 0
    %332 = vmatpush1.bf16.msra.mxu0 0
    %333 = vmatprep.subr.bf16.mxu0 0
    %334 = vmatpush1.bf16.msra.mxu0 0
    %335 = vmatprep.subr.bf16.mxu0 0
    %336 = vmatpush1.bf16.msra.mxu0 0
    %337 = vmatprep.mubr.bf16.mxu0 0
    %338 = vmatmul.mubr.bf16.gmra.mrb[0].mxu0 %v303
    %v339 = vpop.f32.mrb[0].mxu0
    %v340 = vadd.f32 0.0, %v339
    %v341 = vpop.f32.mrb[0].mxu0
    %v342 = vpop.f32.mrb[0].mxu0
    %v343 = vpop.f32.mrb[0].mxu0
    %344 = vdwg.mxu0
    %v345 = vadd.f32 %v297, %v340
    %v346 = vxor.u32 %v345, 2147483648
    %v347 = vmul.f32 %v346, 1.442695
    %v348 = vpow.pop %v347
    %v349 = vadd.f32 %v348, 1.0
    %v350 = vrcp.pop %v349
    %v351 = vmul.f32 1.0, %v350
    %v352 = vtanh.pop %v345
    %v353 = vmul.f32 %v351, %v289
    %355 = vrot.lane.b32.xlu0 %v352, 64
    %v356 = vpop.permute.xlu0 %355
    %v358 = vmul.f32 %v351, %v356
    %360 = vrot.lane.b32.xlu0 %v358, 32
    %v361 = vpop.permute.xlu0 %360
    %v363 = vadd.f32 %v353, %v361
    %v364 = vtanh.pop %v363
    %366 = vrot.lane.b32.xlu0 %v364, 64
    %v367 = vpop.permute.xlu0 %366
    %v369 = vmul.f32 %v351, %v367
    %v374 = vunpack.c.l.b16 %v56
    %v375 = vunpack.c.l.b16 %v57
    %v376 = vunpack.c.l.b16 %v58
    %v377 = vunpack.c.l.b16 %v59
    %v378 = vpack.c.b16 %v375, %v374
    %v379 = vpack.c.b16 %v377, %v376
    %382 = vmatprep.subr.bf16.mxu0 0
    %383 = vmatpush1.bf16.msra.mxu0 %v378
    %384 = vmatprep.subr.bf16.mxu0 0
    %385 = vmatpush1.bf16.msra.mxu0 %v379
    %386 = vmatprep.subr.bf16.mxu0 0
    %387 = vmatpush1.bf16.msra.mxu0 0
    %388 = vmatprep.subr.bf16.mxu0 0
    %389 = vmatpush1.bf16.msra.mxu0 0
    %390 = vmatprep.subr.bf16.mxu0 0
    %391 = vmatpush1.bf16.msra.mxu0 0
    %392 = vmatprep.subr.bf16.mxu0 0
    %393 = vmatpush1.bf16.msra.mxu0 0
    %394 = vmatprep.subr.bf16.mxu0 0
    %395 = vmatpush1.bf16.msra.mxu0 0
    %396 = vmatprep.subr.bf16.mxu0 0
    %397 = vmatpush1.bf16.msra.mxu0 0
    %398 = vmatprep.subr.bf16.mxu0 0
    %399 = vmatpush1.bf16.msra.mxu0 0
    %400 = vmatprep.subr.bf16.mxu0 0
    %401 = vmatpush1.bf16.msra.mxu0 0
    %402 = vmatprep.subr.bf16.mxu0 0
    %403 = vmatpush1.bf16.msra.mxu0 0
    %404 = vmatprep.subr.bf16.mxu0 0
    %405 = vmatpush1.bf16.msra.mxu0 0
    %406 = vmatprep.subr.bf16.mxu0 0
    %407 = vmatpush1.bf16.msra.mxu0 0
    %408 = vmatprep.subr.bf16.mxu0 0
    %409 = vmatpush1.bf16.msra.mxu0 0
    %410 = vmatprep.subr.bf16.mxu0 0
    %411 = vmatpush1.bf16.msra.mxu0 0
    %412 = vmatprep.subr.bf16.mxu0 0
    %413 = vmatpush1.bf16.msra.mxu0 0
    %414 = vmatprep.mubr.bf16.mxu0 0
    %415 = vmatmul.mubr.bf16.gmra.mrb[0].mxu0 %v303
    %v416 = vpop.f32.mrb[0].mxu0
    %v417 = vadd.f32 0.0, %v416
    %v418 = vpop.f32.mrb[0].mxu0
    %v419 = vpop.f32.mrb[0].mxu0
    %v420 = vpop.f32.mrb[0].mxu0
    %421 = vdwg.mxu0
    %v423 = vlaneseq
    %v424 = vshrl.u32 %v423, 7
    %v425 = vsub.s32 0, %v424
    %v426 = vrot.slane %v71, %v425
    %v428 = vadd.f32 %v426, %v417
    %v429 = vpack.c.bf16 %v206, %v206
    %v434 = vunpack.c.l.b16 %v65
    %v435 = vunpack.c.l.b16 %v66
    %v436 = vunpack.c.l.b16 %v67
    %v437 = vunpack.c.l.b16 %v68
    %v438 = vpack.c.b16 %v435, %v434
    %v439 = vpack.c.b16 %v437, %v436
    %v443 = vsel %vm118, %v429, 0
    %445 = vmatprep.subr.bf16.mxu0 0
    %446 = vmatpush1.bf16.msra.mxu0 %v438
    %447 = vmatprep.subr.bf16.mxu0 0
    %448 = vmatpush1.bf16.msra.mxu0 %v439
    %449 = vmatprep.subr.bf16.mxu0 0
    %450 = vmatpush1.bf16.msra.mxu0 0
    %451 = vmatprep.subr.bf16.mxu0 0
    %452 = vmatpush1.bf16.msra.mxu0 0
    %453 = vmatprep.subr.bf16.mxu0 0
    %454 = vmatpush1.bf16.msra.mxu0 0
    %455 = vmatprep.subr.bf16.mxu0 0
    %456 = vmatpush1.bf16.msra.mxu0 0
    %457 = vmatprep.subr.bf16.mxu0 0
    %458 = vmatpush1.bf16.msra.mxu0 0
    %459 = vmatprep.subr.bf16.mxu0 0
    %460 = vmatpush1.bf16.msra.mxu0 0
    %461 = vmatprep.subr.bf16.mxu0 0
    %462 = vmatpush1.bf16.msra.mxu0 0
    %463 = vmatprep.subr.bf16.mxu0 0
    %464 = vmatpush1.bf16.msra.mxu0 0
    %465 = vmatprep.subr.bf16.mxu0 0
    %466 = vmatpush1.bf16.msra.mxu0 0
    %467 = vmatprep.subr.bf16.mxu0 0
    %468 = vmatpush1.bf16.msra.mxu0 0
    %469 = vmatprep.subr.bf16.mxu0 0
    %470 = vmatpush1.bf16.msra.mxu0 0
    %471 = vmatprep.subr.bf16.mxu0 0
    %472 = vmatpush1.bf16.msra.mxu0 0
    %473 = vmatprep.subr.bf16.mxu0 0
    %474 = vmatpush1.bf16.msra.mxu0 0
    %475 = vmatprep.subr.bf16.mxu0 0
    %476 = vmatpush1.bf16.msra.mxu0 0
    %477 = vmatprep.mubr.bf16.mxu0 0
    %478 = vmatmul.mubr.bf16.gmra.mrb[0].mxu0 %v443
    %v479 = vpop.f32.mrb[0].mxu0
    %v480 = vadd.f32 0.0, %v479
    %v481 = vpop.f32.mrb[0].mxu0
    %v482 = vpop.f32.mrb[0].mxu0
    %v483 = vpop.f32.mrb[0].mxu0
    %484 = vdwg.mxu0
    %v485 = vadd.f32 %v428, %v480
    %v486 = vxor.u32 %v485, 2147483648
    %v487 = vmul.f32 %v486, 1.442695
    %v488 = vpow.pop %v487
    %v489 = vadd.f32 %v488, 1.0
    %v490 = vrcp.pop %v489
    %v491 = vmul.f32 1.0, %v490
    %v492 = vtanh.pop %v485
    %494 = vrot.lane.b32.xlu0 %v209, 32
    %v495 = vpop.permute.xlu0 %494
    %v497 = vmul.f32 %v491, %v495
    %499 = vrot.lane.b32.xlu0 %v492, 64
    %v500 = vpop.permute.xlu0 %499
    %v502 = vmul.f32 %v491, %v500
    %504 = vrot.lane.b32.xlu0 %v502, 32
    %v505 = vpop.permute.xlu0 %504
    %v507 = vadd.f32 %v497, %v505
    %v508 = vtanh.pop %v507
    %510 = vrot.lane.b32.xlu0 %v508, 64
    %v511 = vpop.permute.xlu0 %510
    %v513 = vmul.f32 %v491, %v511
    %s514 = scalar_lea.vmem [#allocation2], 16
    %v515 = vld [vmem:[%s514] sm:$0xff]
    %v516 = vpack.c.bf16 %v369, %v369
    %518 = vrot.lane.b32.xlu0 %v516, 32
    %v519 = vpop.permute.xlu0 %518
    %v521 = vsel %vm118, %v519, 0
    %523 = vmatprep.subr.bf16.mxu0 0
    %524 = vmatpush1.bf16.msra.mxu0 %v220
    %525 = vmatprep.subr.bf16.mxu0 0
    %526 = vmatpush1.bf16.msra.mxu0 %v221
    %527 = vmatprep.subr.bf16.mxu0 0
    %528 = vmatpush1.bf16.msra.mxu0 0
    %529 = vmatprep.subr.bf16.mxu0 0
    %530 = vmatpush1.bf16.msra.mxu0 0
    %531 = vmatprep.subr.bf16.mxu0 0
    %532 = vmatpush1.bf16.msra.mxu0 0
    %533 = vmatprep.subr.bf16.mxu0 0
    %534 = vmatpush1.bf16.msra.mxu0 0
    %535 = vmatprep.subr.bf16.mxu0 0
    %536 = vmatpush1.bf16.msra.mxu0 0
    %537 = vmatprep.subr.bf16.mxu0 0
    %538 = vmatpush1.bf16.msra.mxu0 0
    %539 = vmatprep.subr.bf16.mxu0 0
    %540 = vmatpush1.bf16.msra.mxu0 0
    %541 = vmatprep.subr.bf16.mxu0 0
    %542 = vmatpush1.bf16.msra.mxu0 0
    %543 = vmatprep.subr.bf16.mxu0 0
    %544 = vmatpush1.bf16.msra.mxu0 0
    %545 = vmatprep.subr.bf16.mxu0 0
    %546 = vmatpush1.bf16.msra.mxu0 0
    %547 = vmatprep.subr.bf16.mxu0 0
    %548 = vmatpush1.bf16.msra.mxu0 0
    %549 = vmatprep.subr.bf16.mxu0 0
    %550 = vmatpush1.bf16.msra.mxu0 0
    %551 = vmatprep.subr.bf16.mxu0 0
    %552 = vmatpush1.bf16.msra.mxu0 0
    %553 = vmatprep.subr.bf16.mxu0 0
    %554 = vmatpush1.bf16.msra.mxu0 0
    %555 = vmatprep.mubr.bf16.mxu0 0
    %556 = vmatmul.mubr.bf16.gmra.mrb[0].mxu0 %v521
    %v557 = vpop.f32.mrb[0].mxu0
    %v558 = vadd.f32 0.0, %v557
    %v559 = vpop.f32.mrb[0].mxu0
    %v560 = vpop.f32.mrb[0].mxu0
    %v561 = vpop.f32.mrb[0].mxu0
    %562 = vdwg.mxu0
    %v563 = vadd.f32 %v515, %v558
    %v564 = vxor.u32 %v563, 2147483648
    %v565 = vmul.f32 %v564, 1.442695
    %v566 = vpow.pop %v565
    %v567 = vadd.f32 %v566, 1.0
    %v568 = vrcp.pop %v567
    %v569 = vmul.f32 1.0, %v568
    %v570 = vtanh.pop %v563
    %v571 = vmul.f32 %v569, %v363
    %573 = vrot.lane.b32.xlu0 %v570, 64
    %v574 = vpop.permute.xlu0 %573
    %v576 = vmul.f32 %v569, %v574
    %578 = vrot.lane.b32.xlu0 %v576, 32
    %v579 = vpop.permute.xlu0 %578
    %v581 = vadd.f32 %v571, %v579
    %v582 = vtanh.pop %v581
    %584 = vrot.lane.b32.xlu0 %v582, 64
    %v585 = vpop.permute.xlu0 %584
    %v587 = vmul.f32 %v569, %v585
    %588 = vmatprep.subr.bf16.mxu0 0
    %589 = vmatpush1.bf16.msra.mxu0 %v378
    %590 = vmatprep.subr.bf16.mxu0 0
    %591 = vmatpush1.bf16.msra.mxu0 %v379
    %592 = vmatprep.subr.bf16.mxu0 0
    %593 = vmatpush1.bf16.msra.mxu0 0
    %594 = vmatprep.subr.bf16.mxu0 0
    %595 = vmatpush1.bf16.msra.mxu0 0
    %596 = vmatprep.subr.bf16.mxu0 0
    %597 = vmatpush1.bf16.msra.mxu0 0
    %598 = vmatprep.subr.bf16.mxu0 0
    %599 = vmatpush1.bf16.msra.mxu0 0
    %600 = vmatprep.subr.bf16.mxu0 0
    %601 = vmatpush1.bf16.msra.mxu0 0
    %602 = vmatprep.subr.bf16.mxu0 0
    %603 = vmatpush1.bf16.msra.mxu0 0
    %604 = vmatprep.subr.bf16.mxu0 0
    %605 = vmatpush1.bf16.msra.mxu0 0
    %606 = vmatprep.subr.bf16.mxu0 0
    %607 = vmatpush1.bf16.msra.mxu0 0
    %608 = vmatprep.subr.bf16.mxu0 0
    %609 = vmatpush1.bf16.msra.mxu0 0
    %610 = vmatprep.subr.bf16.mxu0 0
    %611 = vmatpush1.bf16.msra.mxu0 0
    %612 = vmatprep.subr.bf16.mxu0 0
    %613 = vmatpush1.bf16.msra.mxu0 0
    %614 = vmatprep.subr.bf16.mxu0 0
    %615 = vmatpush1.bf16.msra.mxu0 0
    %616 = vmatprep.subr.bf16.mxu0 0
    %617 = vmatpush1.bf16.msra.mxu0 0
    %618 = vmatprep.subr.bf16.mxu0 0
    %619 = vmatpush1.bf16.msra.mxu0 0
    %620 = vmatprep.mubr.bf16.mxu0 0
    %621 = vmatmul.mubr.bf16.gmra.mrb[0].mxu0 %v521
    %v622 = vpop.f32.mrb[0].mxu0
    %v623 = vadd.f32 0.0, %v622
    %v624 = vpop.f32.mrb[0].mxu0
    %v625 = vpop.f32.mrb[0].mxu0
    %v626 = vpop.f32.mrb[0].mxu0
    %627 = vdwg.mxu0
    %v628 = vadd.f32 %v426, %v623
    %v629 = vpack.c.bf16 %v513, %v513
    %631 = vrot.lane.b32.xlu0 %v629, 32
    %v632 = vpop.permute.xlu0 %631
    %v634 = vsel %vm118, %v632, 0
    %636 = vmatprep.subr.bf16.mxu0 0
    %637 = vmatpush1.bf16.msra.mxu0 %v438
    %638 = vmatprep.subr.bf16.mxu0 0
    %639 = vmatpush1.bf16.msra.mxu0 %v439
    %640 = vmatprep.subr.bf16.mxu0 0
    %641 = vmatpush1.bf16.msra.mxu0 0
    %642 = vmatprep.subr.bf16.mxu0 0
    %643 = vmatpush1.bf16.msra.mxu0 0
    %644 = vmatprep.subr.bf16.mxu0 0
    %645 = vmatpush1.bf16.msra.mxu0 0
    %646 = vmatprep.subr.bf16.mxu0 0
    %647 = vmatpush1.bf16.msra.mxu0 0
    %648 = vmatprep.subr.bf16.mxu0 0
    %649 = vmatpush1.bf16.msra.mxu0 0
    %650 = vmatprep.subr.bf16.mxu0 0
    %651 = vmatpush1.bf16.msra.mxu0 0
    %652 = vmatprep.subr.bf16.mxu0 0
    %653 = vmatpush1.bf16.msra.mxu0 0
    %654 = vmatprep.subr.bf16.mxu0 0
    %655 = vmatpush1.bf16.msra.mxu0 0
    %656 = vmatprep.subr.bf16.mxu0 0
    %657 = vmatpush1.bf16.msra.mxu0 0
    %658 = vmatprep.subr.bf16.mxu0 0
    %659 = vmatpush1.bf16.msra.mxu0 0
    %660 = vmatprep.subr.bf16.mxu0 0
    %661 = vmatpush1.bf16.msra.mxu0 0
    %662 = vmatprep.subr.bf16.mxu0 0
    %663 = vmatpush1.bf16.msra.mxu0 0
    %664 = vmatprep.subr.bf16.mxu0 0
    %665 = vmatpush1.bf16.msra.mxu0 0
    %666 = vmatprep.subr.bf16.mxu0 0
    %667 = vmatpush1.bf16.msra.mxu0 0
    %668 = vmatprep.mubr.bf16.mxu0 0
    %669 = vmatmul.mubr.bf16.gmra.mrb[0].mxu0 %v634
    %v670 = vpop.f32.mrb[0].mxu0
    %v671 = vadd.f32 0.0, %v670
    %v672 = vpop.f32.mrb[0].mxu0
    %v673 = vpop.f32.mrb[0].mxu0
    %v674 = vpop.f32.mrb[0].mxu0
    %675 = vdwg.mxu0
    %v676 = vadd.f32 %v628, %v671
    %v677 = vxor.u32 %v676, 2147483648
    %v678 = vmul.f32 %v677, 1.442695
    %v679 = vpow.pop %v678
    %v680 = vadd.f32 %v679, 1.0
    %v681 = vrcp.pop %v680
    %v682 = vmul.f32 1.0, %v681
    %v683 = vtanh.pop %v676
    %v684 = vmul.f32 %v682, %v507
    %686 = vrot.lane.b32.xlu0 %v683, 64
    %v687 = vpop.permute.xlu0 %686
    %v689 = vmul.f32 %v682, %v687
    %691 = vrot.lane.b32.xlu0 %v689, 32
    %v692 = vpop.permute.xlu0 %691
    %v694 = vadd.f32 %v684, %v692
    %v695 = vtanh.pop %v694
    %697 = vrot.lane.b32.xlu0 %v695, 64
    %v698 = vpop.permute.xlu0 %697
    %v700 = vmul.f32 %v682, %v698
    %s701 = scalar_lea.vmem [#allocation2], 24
    %v702 = vld [vmem:[%s701] sm:$0xff]
    %v703 = vpack.c.bf16 %v587, %v587
    %705 = vrot.lane.b32.xlu0 %v703, 32
    %v706 = vpop.permute.xlu0 %705
    %v708 = vsel %vm118, %v706, 0
    %710 = vmatprep.subr.bf16.mxu0 0
    %711 = vmatpush1.bf16.msra.mxu0 %v220
    %712 = vmatprep.subr.bf16.mxu0 0
    %713 = vmatpush1.bf16.msra.mxu0 %v221
    %714 = vmatprep.subr.bf16.mxu0 0
    %715 = vmatpush1.bf16.msra.mxu0 0
    %716 = vmatprep.subr.bf16.mxu0 0
    %717 = vmatpush1.bf16.msra.mxu0 0
    %718 = vmatprep.subr.bf16.mxu0 0
    %719 = vmatpush1.bf16.msra.mxu0 0
    %720 = vmatprep.subr.bf16.mxu0 0
    %721 = vmatpush1.bf16.msra.mxu0 0
    %722 = vmatprep.subr.bf16.mxu0 0
    %723 = vmatpush1.bf16.msra.mxu0 0
    %724 = vmatprep.subr.bf16.mxu0 0
    %725 = vmatpush1.bf16.msra.mxu0 0
    %726 = vmatprep.subr.bf16.mxu0 0
    %727 = vmatpush1.bf16.msra.mxu0 0
    %728 = vmatprep.subr.bf16.mxu0 0
    %729 = vmatpush1.bf16.msra.mxu0 0
    %730 = vmatprep.subr.bf16.mxu0 0
    %731 = vmatpush1.bf16.msra.mxu0 0
    %732 = vmatprep.subr.bf16.mxu0 0
    %733 = vmatpush1.bf16.msra.mxu0 0
    %734 = vmatprep.subr.bf16.mxu0 0
    %735 = vmatpush1.bf16.msra.mxu0 0
    %736 = vmatprep.subr.bf16.mxu0 0
    %737 = vmatpush1.bf16.msra.mxu0 0
    %738 = vmatprep.subr.bf16.mxu0 0
    %739 = vmatpush1.bf16.msra.mxu0 0
    %740 = vmatprep.subr.bf16.mxu0 0
    %741 = vmatpush1.bf16.msra.mxu0 0
    %742 = vmatprep.mubr.bf16.mxu0 0
    %743 = vmatmul.mubr.bf16.gmra.mrb[0].mxu0 %v708
    %v744 = vpop.f32.mrb[0].mxu0
    %v745 = vadd.f32 0.0, %v744
    %v746 = vpop.f32.mrb[0].mxu0
    %v747 = vpop.f32.mrb[0].mxu0
    %v748 = vpop.f32.mrb[0].mxu0
    %749 = vdwg.mxu0
    %v750 = vadd.f32 %v702, %v745
    %v751 = vxor.u32 %v750, 2147483648
    %v752 = vmul.f32 %v751, 1.442695
    %v753 = vpow.pop %v752
    %v754 = vadd.f32 %v753, 1.0
    %v755 = vrcp.pop %v754
    %v756 = vmul.f32 1.0, %v755
    %v757 = vtanh.pop %v750
    %v758 = vmul.f32 %v756, %v581
    %760 = vrot.lane.b32.xlu0 %v757, 64
    %v761 = vpop.permute.xlu0 %760
    %v763 = vmul.f32 %v756, %v761
    %765 = vrot.lane.b32.xlu0 %v763, 32
    %v766 = vpop.permute.xlu0 %765
    %v768 = vadd.f32 %v758, %v766
    %v769 = vtanh.pop %v768
    %771 = vrot.lane.b32.xlu0 %v769, 64
    %v772 = vpop.permute.xlu0 %771
    %v774 = vmul.f32 %v756, %v772
    %775 = vmatprep.subr.bf16.mxu0 0
    %776 = vmatpush1.bf16.msra.mxu0 %v378
    %777 = vmatprep.subr.bf16.mxu0 0
    %778 = vmatpush1.bf16.msra.mxu0 %v379
    %779 = vmatprep.subr.bf16.mxu0 0
    %780 = vmatpush1.bf16.msra.mxu0 0
    %781 = vmatprep.subr.bf16.mxu0 0
    %782 = vmatpush1.bf16.msra.mxu0 0
    %783 = vmatprep.subr.bf16.mxu0 0
    %784 = vmatpush1.bf16.msra.mxu0 0
    %785 = vmatprep.subr.bf16.mxu0 0
    %786 = vmatpush1.bf16.msra.mxu0 0
    %787 = vmatprep.subr.bf16.mxu0 0
    %788 = vmatpush1.bf16.msra.mxu0 0
    %789 = vmatprep.subr.bf16.mxu0 0
    %790 = vmatpush1.bf16.msra.mxu0 0
    %791 = vmatprep.subr.bf16.mxu0 0
    %792 = vmatpush1.bf16.msra.mxu0 0
    %793 = vmatprep.subr.bf16.mxu0 0
    %794 = vmatpush1.bf16.msra.mxu0 0
    %795 = vmatprep.subr.bf16.mxu0 0
    %796 = vmatpush1.bf16.msra.mxu0 0
    %797 = vmatprep.subr.bf16.mxu0 0
    %798 = vmatpush1.bf16.msra.mxu0 0
    %799 = vmatprep.subr.bf16.mxu0 0
    %800 = vmatpush1.bf16.msra.mxu0 0
    %801 = vmatprep.subr.bf16.mxu0 0
    %802 = vmatpush1.bf16.msra.mxu0 0
    %803 = vmatprep.subr.bf16.mxu0 0
    %804 = vmatpush1.bf16.msra.mxu0 0
    %805 = vmatprep.subr.bf16.mxu0 0
    %806 = vmatpush1.bf16.msra.mxu0 0
    %807 = vmatprep.mubr.bf16.mxu0 0
    %808 = vmatmul.mubr.bf16.gmra.mrb[0].mxu0 %v708
    %v809 = vpop.f32.mrb[0].mxu0
    %v810 = vadd.f32 0.0, %v809
    %v811 = vpop.f32.mrb[0].mxu0
    %v812 = vpop.f32.mrb[0].mxu0
    %v813 = vpop.f32.mrb[0].mxu0
    %814 = vdwg.mxu0
    %v815 = vadd.f32 %v426, %v810
    %v816 = vpack.c.bf16 %v700, %v700
    %818 = vrot.lane.b32.xlu0 %v816, 32
    %v819 = vpop.permute.xlu0 %818
    %v821 = vsel %vm118, %v819, 0
    %823 = vmatprep.subr.bf16.mxu0 0
    %824 = vmatpush1.bf16.msra.mxu0 %v438
    %825 = vmatprep.subr.bf16.mxu0 0
    %826 = vmatpush1.bf16.msra.mxu0 %v439
    %827 = vmatprep.subr.bf16.mxu0 0
    %828 = vmatpush1.bf16.msra.mxu0 0
    %829 = vmatprep.subr.bf16.mxu0 0
    %830 = vmatpush1.bf16.msra.mxu0 0
    %831 = vmatprep.subr.bf16.mxu0 0
    %832 = vmatpush1.bf16.msra.mxu0 0
    %833 = vmatprep.subr.bf16.mxu0 0
    %834 = vmatpush1.bf16.msra.mxu0 0
    %835 = vmatprep.subr.bf16.mxu0 0
    %836 = vmatpush1.bf16.msra.mxu0 0
    %837 = vmatprep.subr.bf16.mxu0 0
    %838 = vmatpush1.bf16.msra.mxu0 0
    %839 = vmatprep.subr.bf16.mxu0 0
    %840 = vmatpush1.bf16.msra.mxu0 0
    %841 = vmatprep.subr.bf16.mxu0 0
    %842 = vmatpush1.bf16.msra.mxu0 0
    %843 = vmatprep.subr.bf16.mxu0 0
    %844 = vmatpush1.bf16.msra.mxu0 0
    %845 = vmatprep.subr.bf16.mxu0 0
    %846 = vmatpush1.bf16.msra.mxu0 0
    %847 = vmatprep.subr.bf16.mxu0 0
    %848 = vmatpush1.bf16.msra.mxu0 0
    %849 = vmatprep.subr.bf16.mxu0 0
    %850 = vmatpush1.bf16.msra.mxu0 0
    %851 = vmatprep.subr.bf16.mxu0 0
    %852 = vmatpush1.bf16.msra.mxu0 0
    %853 = vmatprep.subr.bf16.mxu0 0
    %854 = vmatpush1.bf16.msra.mxu0 0
    %855 = vmatprep.mubr.bf16.mxu0 0
    %856 = vmatmul.mubr.bf16.gmra.mrb[0].mxu0 %v821
    %v857 = vpop.f32.mrb[0].mxu0
    %v858 = vadd.f32 0.0, %v857
    %v859 = vpop.f32.mrb[0].mxu0
    %v860 = vpop.f32.mrb[0].mxu0
    %v861 = vpop.f32.mrb[0].mxu0
    %862 = vdwg.mxu0
    %v863 = vadd.f32 %v815, %v858
    %v864 = vxor.u32 %v863, 2147483648
    %v865 = vmul.f32 %v864, 1.442695
    %v866 = vpow.pop %v865
    %v867 = vadd.f32 %v866, 1.0
    %v868 = vrcp.pop %v867
    %v869 = vmul.f32 1.0, %v868
    %v870 = vtanh.pop %v863
    %v871 = vmul.f32 %v869, %v694
    %873 = vrot.lane.b32.xlu0 %v870, 64
    %v874 = vpop.permute.xlu0 %873
    %v876 = vmul.f32 %v869, %v874
    %878 = vrot.lane.b32.xlu0 %v876, 32
    %v879 = vpop.permute.xlu0 %878
    %v881 = vadd.f32 %v871, %v879
    %v882 = vtanh.pop %v881
    %884 = vrot.lane.b32.xlu0 %v882, 64
    %v885 = vpop.permute.xlu0 %884
    %v887 = vmul.f32 %v869, %v885
    %s888 = scalar_lea.vmem [#allocation2], 32
    %v889 = vld [vmem:[%s888] sm:$0xff]
    %v890 = vpack.c.bf16 %v774, %v774
    %892 = vrot.lane.b32.xlu0 %v890, 32
    %v893 = vpop.permute.xlu0 %892
    %v895 = vsel %vm118, %v893, 0
    %897 = vmatprep.subr.bf16.mxu0 0
    %898 = vmatpush1.bf16.msra.mxu0 %v220
    %899 = vmatprep.subr.bf16.mxu0 0
    %900 = vmatpush1.bf16.msra.mxu0 %v221
    %901 = vmatprep.subr.bf16.mxu0 0
    %902 = vmatpush1.bf16.msra.mxu0 0
    %903 = vmatprep.subr.bf16.mxu0 0
    %904 = vmatpush1.bf16.msra.mxu0 0
    %905 = vmatprep.subr.bf16.mxu0 0
    %906 = vmatpush1.bf16.msra.mxu0 0
    %907 = vmatprep.subr.bf16.mxu0 0
    %908 = vmatpush1.bf16.msra.mxu0 0
    %909 = vmatprep.subr.bf16.mxu0 0
    %910 = vmatpush1.bf16.msra.mxu0 0
    %911 = vmatprep.subr.bf16.mxu0 0
    %912 = vmatpush1.bf16.msra.mxu0 0
    %913 = vmatprep.subr.bf16.mxu0 0
    %914 = vmatpush1.bf16.msra.mxu0 0
    %915 = vmatprep.subr.bf16.mxu0 0
    %916 = vmatpush1.bf16.msra.mxu0 0
    %917 = vmatprep.subr.bf16.mxu0 0
    %918 = vmatpush1.bf16.msra.mxu0 0
    %919 = vmatprep.subr.bf16.mxu0 0
    %920 = vmatpush1.bf16.msra.mxu0 0
    %921 = vmatprep.subr.bf16.mxu0 0
    %922 = vmatpush1.bf16.msra.mxu0 0
    %923 = vmatprep.subr.bf16.mxu0 0
    %924 = vmatpush1.bf16.msra.mxu0 0
    %925 = vmatprep.subr.bf16.mxu0 0
    %926 = vmatpush1.bf16.msra.mxu0 0
    %927 = vmatprep.subr.bf16.mxu0 0
    %928 = vmatpush1.bf16.msra.mxu0 0
    %929 = vmatprep.mubr.bf16.mxu0 0
    %930 = vmatmul.mubr.bf16.gmra.mrb[0].mxu0 %v895
    %v931 = vpop.f32.mrb[0].mxu0
    %v932 = vadd.f32 0.0, %v931
    %v933 = vpop.f32.mrb[0].mxu0
    %v934 = vpop.f32.mrb[0].mxu0
    %v935 = vpop.f32.mrb[0].mxu0
    %936 = vdwg.mxu0
    %v937 = vadd.f32 %v889, %v932
    %v938 = vxor.u32 %v937, 2147483648
    %v939 = vmul.f32 %v938, 1.442695
    %v940 = vpow.pop %v939
    %v941 = vadd.f32 %v940, 1.0
    %v942 = vrcp.pop %v941
    %v943 = vmul.f32 1.0, %v942
    %v944 = vtanh.pop %v937
    %v945 = vmul.f32 %v943, %v768
    %947 = vrot.lane.b32.xlu0 %v944, 64
    %v948 = vpop.permute.xlu0 %947
    %v950 = vmul.f32 %v943, %v948
    %952 = vrot.lane.b32.xlu0 %v950, 32
    %v953 = vpop.permute.xlu0 %952
    %v955 = vadd.f32 %v945, %v953
    %v956 = vtanh.pop %v955
    %958 = vrot.lane.b32.xlu0 %v956, 64
    %v959 = vpop.permute.xlu0 %958
    %v961 = vmul.f32 %v943, %v959
    %962 = vmatprep.subr.bf16.mxu0 0
    %963 = vmatpush1.bf16.msra.mxu0 %v378
    %964 = vmatprep.subr.bf16.mxu0 0
    %965 = vmatpush1.bf16.msra.mxu0 %v379
    %966 = vmatprep.subr.bf16.mxu0 0
    %967 = vmatpush1.bf16.msra.mxu0 0
    %968 = vmatprep.subr.bf16.mxu0 0
    %969 = vmatpush1.bf16.msra.mxu0 0
    %970 = vmatprep.subr.bf16.mxu0 0
    %971 = vmatpush1.bf16.msra.mxu0 0
    %972 = vmatprep.subr.bf16.mxu0 0
    %973 = vmatpush1.bf16.msra.mxu0 0
    %974 = vmatprep.subr.bf16.mxu0 0
    %975 = vmatpush1.bf16.msra.mxu0 0
    %976 = vmatprep.subr.bf16.mxu0 0
    %977 = vmatpush1.bf16.msra.mxu0 0
    %978 = vmatprep.subr.bf16.mxu0 0
    %979 = vmatpush1.bf16.msra.mxu0 0
    %980 = vmatprep.subr.bf16.mxu0 0
    %981 = vmatpush1.bf16.msra.mxu0 0
    %982 = vmatprep.subr.bf16.mxu0 0
    %983 = vmatpush1.bf16.msra.mxu0 0
    %984 = vmatprep.subr.bf16.mxu0 0
    %985 = vmatpush1.bf16.msra.mxu0 0
    %986 = vmatprep.subr.bf16.mxu0 0
    %987 = vmatpush1.bf16.msra.mxu0 0
    %988 = vmatprep.subr.bf16.mxu0 0
    %989 = vmatpush1.bf16.msra.mxu0 0
    %990 = vmatprep.subr.bf16.mxu0 0
    %991 = vmatpush1.bf16.msra.mxu0 0
    %992 = vmatprep.subr.bf16.mxu0 0
    %993 = vmatpush1.bf16.msra.mxu0 0
    %994 = vmatprep.mubr.bf16.mxu0 0
    %995 = vmatmul.mubr.bf16.gmra.mrb[0].mxu0 %v895
    %v996 = vpop.f32.mrb[0].mxu0
    %v997 = vadd.f32 0.0, %v996
    %v998 = vpop.f32.mrb[0].mxu0
    %v999 = vpop.f32.mrb[0].mxu0
    %v1000 = vpop.f32.mrb[0].mxu0
    %1001 = vdwg.mxu0
    %v1002 = vadd.f32 %v426, %v997
    %v1003 = vpack.c.bf16 %v887, %v887
    %1005 = vrot.lane.b32.xlu0 %v1003, 32
    %v1006 = vpop.permute.xlu0 %1005
    %v1008 = vsel %vm118, %v1006, 0
    %1010 = vmatprep.subr.bf16.mxu0 0
    %1011 = vmatpush1.bf16.msra.mxu0 %v438
    %1012 = vmatprep.subr.bf16.mxu0 0
    %1013 = vmatpush1.bf16.msra.mxu0 %v439
    %1014 = vmatprep.subr.bf16.mxu0 0
    %1015 = vmatpush1.bf16.msra.mxu0 0
    %1016 = vmatprep.subr.bf16.mxu0 0
    %1017 = vmatpush1.bf16.msra.mxu0 0
    %1018 = vmatprep.subr.bf16.mxu0 0
    %1019 = vmatpush1.bf16.msra.mxu0 0
    %1020 = vmatprep.subr.bf16.mxu0 0
    %1021 = vmatpush1.bf16.msra.mxu0 0
    %1022 = vmatprep.subr.bf16.mxu0 0
    %1023 = vmatpush1.bf16.msra.mxu0 0
    %1024 = vmatprep.subr.bf16.mxu0 0
    %1025 = vmatpush1.bf16.msra.mxu0 0
    %1026 = vmatprep.subr.bf16.mxu0 0
    %1027 = vmatpush1.bf16.msra.mxu0 0
    %1028 = vmatprep.subr.bf16.mxu0 0
    %1029 = vmatpush1.bf16.msra.mxu0 0
    %1030 = vmatprep.subr.bf16.mxu0 0
    %1031 = vmatpush1.bf16.msra.mxu0 0
    %1032 = vmatprep.subr.bf16.mxu0 0
    %1033 = vmatpush1.bf16.msra.mxu0 0
    %1034 = vmatprep.subr.bf16.mxu0 0
    %1035 = vmatpush1.bf16.msra.mxu0 0
    %1036 = vmatprep.subr.bf16.mxu0 0
    %1037 = vmatpush1.bf16.msra.mxu0 0
    %1038 = vmatprep.subr.bf16.mxu0 0
    %1039 = vmatpush1.bf16.msra.mxu0 0
    %1040 = vmatprep.subr.bf16.mxu0 0
    %1041 = vmatpush1.bf16.msra.mxu0 0
    %1042 = vmatprep.mubr.bf16.mxu0 0
    %1043 = vmatmul.mubr.bf16.gmra.mrb[0].mxu0 %v1008
    %v1044 = vpop.f32.mrb[0].mxu0
    %v1045 = vadd.f32 0.0, %v1044
    %v1046 = vpop.f32.mrb[0].mxu0
    %v1047 = vpop.f32.mrb[0].mxu0
    %v1048 = vpop.f32.mrb[0].mxu0
    %1049 = vdwg.mxu0
    %v1050 = vadd.f32 %v1002, %v1045
    %v1051 = vxor.u32 %v1050, 2147483648
    %v1052 = vmul.f32 %v1051, 1.442695
    %v1053 = vpow.pop %v1052
    %v1054 = vadd.f32 %v1053, 1.0
    %v1055 = vrcp.pop %v1054
    %v1056 = vmul.f32 1.0, %v1055
    %v1057 = vtanh.pop %v1050
    %v1058 = vmul.f32 %v1056, %v881
    %1060 = vrot.lane.b32.xlu0 %v1057, 64
    %v1061 = vpop.permute.xlu0 %1060
    %v1063 = vmul.f32 %v1056, %v1061
    %1065 = vrot.lane.b32.xlu0 %v1063, 32
    %v1066 = vpop.permute.xlu0 %1065
    %v1068 = vadd.f32 %v1058, %v1066
    %v1069 = vtanh.pop %v1068
    %1071 = vrot.lane.b32.xlu0 %v1069, 64
    %v1072 = vpop.permute.xlu0 %1071
    %v1074 = vmul.f32 %v1056, %v1072
    %s1075 = scalar_lea.vmem [#allocation2], 40
    %v1076 = vld [vmem:[%s1075] sm:$0xff]
    %v1077 = vpack.c.bf16 %v961, %v961
    %1079 = vrot.lane.b32.xlu0 %v1077, 32
    %v1080 = vpop.permute.xlu0 %1079
    %v1082 = vsel %vm118, %v1080, 0
    %1084 = vmatprep.subr.bf16.mxu0 0
    %1085 = vmatpush1.bf16.msra.mxu0 %v220
    %1086 = vmatprep.subr.bf16.mxu0 0
    %1087 = vmatpush1.bf16.msra.mxu0 %v221
    %1088 = vmatprep.subr.bf16.mxu0 0
    %1089 = vmatpush1.bf16.msra.mxu0 0
    %1090 = vmatprep.subr.bf16.mxu0 0
    %1091 = vmatpush1.bf16.msra.mxu0 0
    %1092 = vmatprep.subr.bf16.mxu0 0
    %1093 = vmatpush1.bf16.msra.mxu0 0
    %1094 = vmatprep.subr.bf16.mxu0 0
    %1095 = vmatpush1.bf16.msra.mxu0 0
    %1096 = vmatprep.subr.bf16.mxu0 0
    %1097 = vmatpush1.bf16.msra.mxu0 0
    %1098 = vmatprep.subr.bf16.mxu0 0
    %1099 = vmatpush1.bf16.msra.mxu0 0
    %1100 = vmatprep.subr.bf16.mxu0 0
    %1101 = vmatpush1.bf16.msra.mxu0 0
    %1102 = vmatprep.subr.bf16.mxu0 0
    %1103 = vmatpush1.bf16.msra.mxu0 0
    %1104 = vmatprep.subr.bf16.mxu0 0
    %1105 = vmatpush1.bf16.msra.mxu0 0
    %1106 = vmatprep.subr.bf16.mxu0 0
    %1107 = vmatpush1.bf16.msra.mxu0 0
    %1108 = vmatprep.subr.bf16.mxu0 0
    %1109 = vmatpush1.bf16.msra.mxu0 0
    %1110 = vmatprep.subr.bf16.mxu0 0
    %1111 = vmatpush1.bf16.msra.mxu0 0
    %1112 = vmatprep.subr.bf16.mxu0 0
    %1113 = vmatpush1.bf16.msra.mxu0 0
    %1114 = vmatprep.subr.bf16.mxu0 0
    %1115 = vmatpush1.bf16.msra.mxu0 0
    %1116 = vmatprep.mubr.bf16.mxu0 0
    %1117 = vmatmul.mubr.bf16.gmra.mrb[0].mxu0 %v1082
    %v1118 = vpop.f32.mrb[0].mxu0
    %v1119 = vadd.f32 0.0, %v1118
    %v1120 = vpop.f32.mrb[0].mxu0
    %v1121 = vpop.f32.mrb[0].mxu0
    %v1122 = vpop.f32.mrb[0].mxu0
    %1123 = vdwg.mxu0
    %v1124 = vadd.f32 %v1076, %v1119
    %v1125 = vxor.u32 %v1124, 2147483648
    %v1126 = vmul.f32 %v1125, 1.442695
    %v1127 = vpow.pop %v1126
    %v1128 = vadd.f32 %v1127, 1.0
    %v1129 = vrcp.pop %v1128
    %v1130 = vmul.f32 1.0, %v1129
    %v1131 = vtanh.pop %v1124
    %v1132 = vmul.f32 %v1130, %v955
    %1134 = vrot.lane.b32.xlu0 %v1131, 64
    %v1135 = vpop.permute.xlu0 %1134
    %v1137 = vmul.f32 %v1130, %v1135
    %1139 = vrot.lane.b32.xlu0 %v1137, 32
    %v1140 = vpop.permute.xlu0 %1139
    %v1142 = vadd.f32 %v1132, %v1140
    %v1143 = vtanh.pop %v1142
    %1145 = vrot.lane.b32.xlu0 %v1143, 64
    %v1146 = vpop.permute.xlu0 %1145
    %v1148 = vmul.f32 %v1130, %v1146
    %1149 = vmatprep.subr.bf16.mxu0 0
    %1150 = vmatpush1.bf16.msra.mxu0 %v378
    %1151 = vmatprep.subr.bf16.mxu0 0
    %1152 = vmatpush1.bf16.msra.mxu0 %v379
    %1153 = vmatprep.subr.bf16.mxu0 0
    %1154 = vmatpush1.bf16.msra.mxu0 0
    %1155 = vmatprep.subr.bf16.mxu0 0
    %1156 = vmatpush1.bf16.msra.mxu0 0
    %1157 = vmatprep.subr.bf16.mxu0 0
    %1158 = vmatpush1.bf16.msra.mxu0 0
    %1159 = vmatprep.subr.bf16.mxu0 0
    %1160 = vmatpush1.bf16.msra.mxu0 0
    %1161 = vmatprep.subr.bf16.mxu0 0
    %1162 = vmatpush1.bf16.msra.mxu0 0
    %1163 = vmatprep.subr.bf16.mxu0 0
    %1164 = vmatpush1.bf16.msra.mxu0 0
    %1165 = vmatprep.subr.bf16.mxu0 0
    %1166 = vmatpush1.bf16.msra.mxu0 0
    %1167 = vmatprep.subr.bf16.mxu0 0
    %1168 = vmatpush1.bf16.msra.mxu0 0
    %1169 = vmatprep.subr.bf16.mxu0 0
    %1170 = vmatpush1.bf16.msra.mxu0 0
    %1171 = vmatprep.subr.bf16.mxu0 0
    %1172 = vmatpush1.bf16.msra.mxu0 0
    %1173 = vmatprep.subr.bf16.mxu0 0
    %1174 = vmatpush1.bf16.msra.mxu0 0
    %1175 = vmatprep.subr.bf16.mxu0 0
    %1176 = vmatpush1.bf16.msra.mxu0 0
    %1177 = vmatprep.subr.bf16.mxu0 0
    %1178 = vmatpush1.bf16.msra.mxu0 0
    %1179 = vmatprep.subr.bf16.mxu0 0
    %1180 = vmatpush1.bf16.msra.mxu0 0
    %1181 = vmatprep.mubr.bf16.mxu0 0
    %1182 = vmatmul.mubr.bf16.gmra.mrb[0].mxu0 %v1082
    %v1183 = vpop.f32.mrb[0].mxu0
    %v1184 = vadd.f32 0.0, %v1183
    %v1185 = vpop.f32.mrb[0].mxu0
    %v1186 = vpop.f32.mrb[0].mxu0
    %v1187 = vpop.f32.mrb[0].mxu0
    %1188 = vdwg.mxu0
    %v1189 = vadd.f32 %v426, %v1184
    %v1190 = vpack.c.bf16 %v1074, %v1074
    %1192 = vrot.lane.b32.xlu0 %v1190, 32
    %v1193 = vpop.permute.xlu0 %1192
    %v1195 = vsel %vm118, %v1193, 0
    %1197 = vmatprep.subr.bf16.mxu0 0
    %1198 = vmatpush1.bf16.msra.mxu0 %v438
    %1199 = vmatprep.subr.bf16.mxu0 0
    %1200 = vmatpush1.bf16.msra.mxu0 %v439
    %1201 = vmatprep.subr.bf16.mxu0 0
    %1202 = vmatpush1.bf16.msra.mxu0 0
    %1203 = vmatprep.subr.bf16.mxu0 0
    %1204 = vmatpush1.bf16.msra.mxu0 0
    %1205 = vmatprep.subr.bf16.mxu0 0
    %1206 = vmatpush1.bf16.msra.mxu0 0
    %1207 = vmatprep.subr.bf16.mxu0 0
    %1208 = vmatpush1.bf16.msra.mxu0 0
    %1209 = vmatprep.subr.bf16.mxu0 0
    %1210 = vmatpush1.bf16.msra.mxu0 0
    %1211 = vmatprep.subr.bf16.mxu0 0
    %1212 = vmatpush1.bf16.msra.mxu0 0
    %1213 = vmatprep.subr.bf16.mxu0 0
    %1214 = vmatpush1.bf16.msra.mxu0 0
    %1215 = vmatprep.subr.bf16.mxu0 0
    %1216 = vmatpush1.bf16.msra.mxu0 0
    %1217 = vmatprep.subr.bf16.mxu0 0
    %1218 = vmatpush1.bf16.msra.mxu0 0
    %1219 = vmatprep.subr.bf16.mxu0 0
    %1220 = vmatpush1.bf16.msra.mxu0 0
    %1221 = vmatprep.subr.bf16.mxu0 0
    %1222 = vmatpush1.bf16.msra.mxu0 0
    %1223 = vmatprep.subr.bf16.mxu0 0
    %1224 = vmatpush1.bf16.msra.mxu0 0
    %1225 = vmatprep.subr.bf16.mxu0 0
    %1226 = vmatpush1.bf16.msra.mxu0 0
    %1227 = vmatprep.subr.bf16.mxu0 0
    %1228 = vmatpush1.bf16.msra.mxu0 0
    %1229 = vmatprep.mubr.bf16.mxu0 0
    %1230 = vmatmul.mubr.bf16.gmra.mrb[0].mxu0 %v1195
    %v1231 = vpop.f32.mrb[0].mxu0
    %v1232 = vadd.f32 0.0, %v1231
    %v1233 = vpop.f32.mrb[0].mxu0
    %v1234 = vpop.f32.mrb[0].mxu0
    %v1235 = vpop.f32.mrb[0].mxu0
    %1236 = vdwg.mxu0
    %v1237 = vadd.f32 %v1189, %v1232
    %v1238 = vxor.u32 %v1237, 2147483648
    %v1239 = vmul.f32 %v1238, 1.442695
    %v1240 = vpow.pop %v1239
    %v1241 = vadd.f32 %v1240, 1.0
    %v1242 = vrcp.pop %v1241
    %v1243 = vmul.f32 1.0, %v1242
    %v1244 = vtanh.pop %v1237
    %v1245 = vmul.f32 %v1243, %v1068
    %1247 = vrot.lane.b32.xlu0 %v1244, 64
    %v1248 = vpop.permute.xlu0 %1247
    %v1250 = vmul.f32 %v1243, %v1248
    %1252 = vrot.lane.b32.xlu0 %v1250, 32
    %v1253 = vpop.permute.xlu0 %1252
    %v1255 = vadd.f32 %v1245, %v1253
    %v1256 = vtanh.pop %v1255
    %1258 = vrot.lane.b32.xlu0 %v1256, 64
    %v1259 = vpop.permute.xlu0 %1258
    %v1261 = vmul.f32 %v1243, %v1259
    %s1262 = scalar_lea.vmem [#allocation2], 48
    %v1263 = vld [vmem:[%s1262] sm:$0xff]
    %v1264 = vpack.c.bf16 %v1148, %v1148
    %1266 = vrot.lane.b32.xlu0 %v1264, 32
    %v1267 = vpop.permute.xlu0 %1266
    %v1269 = vsel %vm118, %v1267, 0
    %1271 = vmatprep.subr.bf16.mxu0 0
    %1272 = vmatpush1.bf16.msra.mxu0 %v220
    %1273 = vmatprep.subr.bf16.mxu0 0
    %1274 = vmatpush1.bf16.msra.mxu0 %v221
    %1275 = vmatprep.subr.bf16.mxu0 0
    %1276 = vmatpush1.bf16.msra.mxu0 0
    %1277 = vmatprep.subr.bf16.mxu0 0
    %1278 = vmatpush1.bf16.msra.mxu0 0
    %1279 = vmatprep.subr.bf16.mxu0 0
    %1280 = vmatpush1.bf16.msra.mxu0 0
    %1281 = vmatprep.subr.bf16.mxu0 0
    %1282 = vmatpush1.bf16.msra.mxu0 0
    %1283 = vmatprep.subr.bf16.mxu0 0
    %1284 = vmatpush1.bf16.msra.mxu0 0
    %1285 = vmatprep.subr.bf16.mxu0 0
    %1286 = vmatpush1.bf16.msra.mxu0 0
    %1287 = vmatprep.subr.bf16.mxu0 0
    %1288 = vmatpush1.bf16.msra.mxu0 0
    %1289 = vmatprep.subr.bf16.mxu0 0
    %1290 = vmatpush1.bf16.msra.mxu0 0
    %1291 = vmatprep.subr.bf16.mxu0 0
    %1292 = vmatpush1.bf16.msra.mxu0 0
    %1293 = vmatprep.subr.bf16.mxu0 0
    %1294 = vmatpush1.bf16.msra.mxu0 0
    %1295 = vmatprep.subr.bf16.mxu0 0
    %1296 = vmatpush1.bf16.msra.mxu0 0
    %1297 = vmatprep.subr.bf16.mxu0 0
    %1298 = vmatpush1.bf16.msra.mxu0 0
    %1299 = vmatprep.subr.bf16.mxu0 0
    %1300 = vmatpush1.bf16.msra.mxu0 0
    %1301 = vmatprep.subr.bf16.mxu0 0
    %1302 = vmatpush1.bf16.msra.mxu0 0
    %1303 = vmatprep.mubr.bf16.mxu0 0
    %1304 = vmatmul.mubr.bf16.gmra.mrb[0].mxu0 %v1269
    %v1305 = vpop.f32.mrb[0].mxu0
    %v1306 = vadd.f32 0.0, %v1305
    %v1307 = vpop.f32.mrb[0].mxu0
    %v1308 = vpop.f32.mrb[0].mxu0
    %v1309 = vpop.f32.mrb[0].mxu0
    %1310 = vdwg.mxu0
    %v1311 = vadd.f32 %v1263, %v1306
    %v1312 = vxor.u32 %v1311, 2147483648
    %v1313 = vmul.f32 %v1312, 1.442695
    %v1314 = vpow.pop %v1313
    %v1315 = vadd.f32 %v1314, 1.0
    %v1316 = vrcp.pop %v1315
    %v1317 = vmul.f32 1.0, %v1316
    %v1318 = vtanh.pop %v1311
    %v1319 = vmul.f32 %v1317, %v1142
    %1321 = vrot.lane.b32.xlu0 %v1318, 64
    %v1322 = vpop.permute.xlu0 %1321
    %v1324 = vmul.f32 %v1317, %v1322
    %1326 = vrot.lane.b32.xlu0 %v1324, 32
    %v1327 = vpop.permute.xlu0 %1326
    %v1329 = vadd.f32 %v1319, %v1327
    %v1330 = vtanh.pop %v1329
    %1332 = vrot.lane.b32.xlu0 %v1330, 64
    %v1333 = vpop.permute.xlu0 %1332
    %v1335 = vmul.f32 %v1317, %v1333
    %1336 = vmatprep.subr.bf16.mxu0 0
    %1337 = vmatpush1.bf16.msra.mxu0 %v378
    %1338 = vmatprep.subr.bf16.mxu0 0
    %1339 = vmatpush1.bf16.msra.mxu0 %v379
    %1340 = vmatprep.subr.bf16.mxu0 0
    %1341 = vmatpush1.bf16.msra.mxu0 0
    %1342 = vmatprep.subr.bf16.mxu0 0
    %1343 = vmatpush1.bf16.msra.mxu0 0
    %1344 = vmatprep.subr.bf16.mxu0 0
    %1345 = vmatpush1.bf16.msra.mxu0 0
    %1346 = vmatprep.subr.bf16.mxu0 0
    %1347 = vmatpush1.bf16.msra.mxu0 0
    %1348 = vmatprep.subr.bf16.mxu0 0
    %1349 = vmatpush1.bf16.msra.mxu0 0
    %1350 = vmatprep.subr.bf16.mxu0 0
    %1351 = vmatpush1.bf16.msra.mxu0 0
    %1352 = vmatprep.subr.bf16.mxu0 0
    %1353 = vmatpush1.bf16.msra.mxu0 0
    %1354 = vmatprep.subr.bf16.mxu0 0
    %1355 = vmatpush1.bf16.msra.mxu0 0
    %1356 = vmatprep.subr.bf16.mxu0 0
    %1357 = vmatpush1.bf16.msra.mxu0 0
    %1358 = vmatprep.subr.bf16.mxu0 0
    %1359 = vmatpush1.bf16.msra.mxu0 0
    %1360 = vmatprep.subr.bf16.mxu0 0
    %1361 = vmatpush1.bf16.msra.mxu0 0
    %1362 = vmatprep.subr.bf16.mxu0 0
    %1363 = vmatpush1.bf16.msra.mxu0 0
    %1364 = vmatprep.subr.bf16.mxu0 0
    %1365 = vmatpush1.bf16.msra.mxu0 0
    %1366 = vmatprep.subr.bf16.mxu0 0
    %1367 = vmatpush1.bf16.msra.mxu0 0
    %1368 = vmatprep.mubr.bf16.mxu0 0
    %1369 = vmatmul.mubr.bf16.gmra.mrb[0].mxu0 %v1269
    %v1370 = vpop.f32.mrb[0].mxu0
    %v1371 = vadd.f32 0.0, %v1370
    %v1372 = vpop.f32.mrb[0].mxu0
    %v1373 = vpop.f32.mrb[0].mxu0
    %v1374 = vpop.f32.mrb[0].mxu0
    %1375 = vdwg.mxu0
    %v1376 = vadd.f32 %v426, %v1371
    %v1377 = vpack.c.bf16 %v1261, %v1261
    %1379 = vrot.lane.b32.xlu0 %v1377, 32
    %v1380 = vpop.permute.xlu0 %1379
    %v1382 = vsel %vm118, %v1380, 0
    %1384 = vmatprep.subr.bf16.mxu0 0
    %1385 = vmatpush1.bf16.msra.mxu0 %v438
    %1386 = vmatprep.subr.bf16.mxu0 0
    %1387 = vmatpush1.bf16.msra.mxu0 %v439
    %1388 = vmatprep.subr.bf16.mxu0 0
    %1389 = vmatpush1.bf16.msra.mxu0 0
    %1390 = vmatprep.subr.bf16.mxu0 0
    %1391 = vmatpush1.bf16.msra.mxu0 0
    %1392 = vmatprep.subr.bf16.mxu0 0
    %1393 = vmatpush1.bf16.msra.mxu0 0
    %1394 = vmatprep.subr.bf16.mxu0 0
    %1395 = vmatpush1.bf16.msra.mxu0 0
    %1396 = vmatprep.subr.bf16.mxu0 0
    %1397 = vmatpush1.bf16.msra.mxu0 0
    %1398 = vmatprep.subr.bf16.mxu0 0
    %1399 = vmatpush1.bf16.msra.mxu0 0
    %1400 = vmatprep.subr.bf16.mxu0 0
    %1401 = vmatpush1.bf16.msra.mxu0 0
    %1402 = vmatprep.subr.bf16.mxu0 0
    %1403 = vmatpush1.bf16.msra.mxu0 0
    %1404 = vmatprep.subr.bf16.mxu0 0
    %1405 = vmatpush1.bf16.msra.mxu0 0
    %1406 = vmatprep.subr.bf16.mxu0 0
    %1407 = vmatpush1.bf16.msra.mxu0 0
    %1408 = vmatprep.subr.bf16.mxu0 0
    %1409 = vmatpush1.bf16.msra.mxu0 0
    %1410 = vmatprep.subr.bf16.mxu0 0
    %1411 = vmatpush1.bf16.msra.mxu0 0
    %1412 = vmatprep.subr.bf16.mxu0 0
    %1413 = vmatpush1.bf16.msra.mxu0 0
    %1414 = vmatprep.subr.bf16.mxu0 0
    %1415 = vmatpush1.bf16.msra.mxu0 0
    %1416 = vmatprep.mubr.bf16.mxu0 0
    %1417 = vmatmul.mubr.bf16.gmra.mrb[0].mxu0 %v1382
    %v1418 = vpop.f32.mrb[0].mxu0
    %v1419 = vadd.f32 0.0, %v1418
    %v1420 = vpop.f32.mrb[0].mxu0
    %v1421 = vpop.f32.mrb[0].mxu0
    %v1422 = vpop.f32.mrb[0].mxu0
    %1423 = vdwg.mxu0
    %v1424 = vadd.f32 %v1376, %v1419
    %v1425 = vxor.u32 %v1424, 2147483648
    %v1426 = vmul.f32 %v1425, 1.442695
    %v1427 = vpow.pop %v1426
    %v1428 = vadd.f32 %v1427, 1.0
    %v1429 = vrcp.pop %v1428
    %v1430 = vmul.f32 1.0, %v1429
    %v1431 = vtanh.pop %v1424
    %v1432 = vmul.f32 %v1430, %v1255
    %1434 = vrot.lane.b32.xlu0 %v1431, 64
    %v1435 = vpop.permute.xlu0 %1434
    %v1437 = vmul.f32 %v1430, %v1435
    %1439 = vrot.lane.b32.xlu0 %v1437, 32
    %v1440 = vpop.permute.xlu0 %1439
    %v1442 = vadd.f32 %v1432, %v1440
    %v1443 = vtanh.pop %v1442
    %1445 = vrot.lane.b32.xlu0 %v1443, 64
    %v1446 = vpop.permute.xlu0 %1445
    %v1448 = vmul.f32 %v1430, %v1446
    %s1449 = scalar_lea.vmem [#allocation2], 56
    %v1450 = vld [vmem:[%s1449] sm:$0xff]
    %v1451 = vpack.c.bf16 %v1335, %v1335
    %1453 = vrot.lane.b32.xlu0 %v1451, 32
    %v1454 = vpop.permute.xlu0 %1453
    %v1456 = vsel %vm118, %v1454, 0
    %1458 = vmatprep.subr.bf16.mxu0 0
    %1459 = vmatpush1.bf16.msra.mxu0 %v220
    %1460 = vmatprep.subr.bf16.mxu0 0
    %1461 = vmatpush1.bf16.msra.mxu0 %v221
    %1462 = vmatprep.subr.bf16.mxu0 0
    %1463 = vmatpush1.bf16.msra.mxu0 0
    %1464 = vmatprep.subr.bf16.mxu0 0
    %1465 = vmatpush1.bf16.msra.mxu0 0
    %1466 = vmatprep.subr.bf16.mxu0 0
    %1467 = vmatpush1.bf16.msra.mxu0 0
    %1468 = vmatprep.subr.bf16.mxu0 0
    %1469 = vmatpush1.bf16.msra.mxu0 0
    %1470 = vmatprep.subr.bf16.mxu0 0
    %1471 = vmatpush1.bf16.msra.mxu0 0
    %1472 = vmatprep.subr.bf16.mxu0 0
    %1473 = vmatpush1.bf16.msra.mxu0 0
    %1474 = vmatprep.subr.bf16.mxu0 0
    %1475 = vmatpush1.bf16.msra.mxu0 0
    %1476 = vmatprep.subr.bf16.mxu0 0
    %1477 = vmatpush1.bf16.msra.mxu0 0
    %1478 = vmatprep.subr.bf16.mxu0 0
    %1479 = vmatpush1.bf16.msra.mxu0 0
    %1480 = vmatprep.subr.bf16.mxu0 0
    %1481 = vmatpush1.bf16.msra.mxu0 0
    %1482 = vmatprep.subr.bf16.mxu0 0
    %1483 = vmatpush1.bf16.msra.mxu0 0
    %1484 = vmatprep.subr.bf16.mxu0 0
    %1485 = vmatpush1.bf16.msra.mxu0 0
    %1486 = vmatprep.subr.bf16.mxu0 0
    %1487 = vmatpush1.bf16.msra.mxu0 0
    %1488 = vmatprep.subr.bf16.mxu0 0
    %1489 = vmatpush1.bf16.msra.mxu0 0
    %1490 = vmatprep.mubr.bf16.mxu0 0
    %1491 = vmatmul.mubr.bf16.gmra.mrb[0].mxu0 %v1456
    %v1492 = vpop.f32.mrb[0].mxu0
    %v1493 = vadd.f32 0.0, %v1492
    %v1494 = vpop.f32.mrb[0].mxu0
    %v1495 = vpop.f32.mrb[0].mxu0
    %v1496 = vpop.f32.mrb[0].mxu0
    %1497 = vdwg.mxu0
    %v1498 = vadd.f32 %v1450, %v1493
    %v1499 = vxor.u32 %v1498, 2147483648
    %v1500 = vmul.f32 %v1499, 1.442695
    %v1501 = vpow.pop %v1500
    %v1502 = vadd.f32 %v1501, 1.0
    %v1503 = vrcp.pop %v1502
    %v1504 = vmul.f32 1.0, %v1503
    %v1505 = vtanh.pop %v1498
    %v1506 = vmul.f32 %v1504, %v1329
    %1508 = vrot.lane.b32.xlu0 %v1505, 64
    %v1509 = vpop.permute.xlu0 %1508
    %v1511 = vmul.f32 %v1504, %v1509
    %1513 = vrot.lane.b32.xlu0 %v1511, 32
    %v1514 = vpop.permute.xlu0 %1513
    %v1516 = vadd.f32 %v1506, %v1514
    %v1517 = vtanh.pop %v1516
    %1519 = vrot.lane.b32.xlu0 %v1517, 64
    %v1520 = vpop.permute.xlu0 %1519
    %v1522 = vmul.f32 %v1504, %v1520
    %1523 = vmatprep.subr.bf16.mxu0 0
    %1524 = vmatpush1.bf16.msra.mxu0 %v378
    %1525 = vmatprep.subr.bf16.mxu0 0
    %1526 = vmatpush1.bf16.msra.mxu0 %v379
    %1527 = vmatprep.subr.bf16.mxu0 0
    %1528 = vmatpush1.bf16.msra.mxu0 0
    %1529 = vmatprep.subr.bf16.mxu0 0
    %1530 = vmatpush1.bf16.msra.mxu0 0
    %1531 = vmatprep.subr.bf16.mxu0 0
    %1532 = vmatpush1.bf16.msra.mxu0 0
    %1533 = vmatprep.subr.bf16.mxu0 0
    %1534 = vmatpush1.bf16.msra.mxu0 0
    %1535 = vmatprep.subr.bf16.mxu0 0
    %1536 = vmatpush1.bf16.msra.mxu0 0
    %1537 = vmatprep.subr.bf16.mxu0 0
    %1538 = vmatpush1.bf16.msra.mxu0 0
    %1539 = vmatprep.subr.bf16.mxu0 0
    %1540 = vmatpush1.bf16.msra.mxu0 0
    %1541 = vmatprep.subr.bf16.mxu0 0
    %1542 = vmatpush1.bf16.msra.mxu0 0
    %1543 = vmatprep.subr.bf16.mxu0 0
    %1544 = vmatpush1.bf16.msra.mxu0 0
    %1545 = vmatprep.subr.bf16.mxu0 0
    %1546 = vmatpush1.bf16.msra.mxu0 0
    %1547 = vmatprep.subr.bf16.mxu0 0
    %1548 = vmatpush1.bf16.msra.mxu0 0
    %1549 = vmatprep.subr.bf16.mxu0 0
    %1550 = vmatpush1.bf16.msra.mxu0 0
    %1551 = vmatprep.subr.bf16.mxu0 0
    %1552 = vmatpush1.bf16.msra.mxu0 0
    %1553 = vmatprep.subr.bf16.mxu0 0
    %1554 = vmatpush1.bf16.msra.mxu0 0
    %1555 = vmatprep.mubr.bf16.mxu0 0
    %1556 = vmatmul.mubr.bf16.gmra.mrb[0].mxu0 %v1456
    %v1557 = vpop.f32.mrb[0].mxu0
    %v1558 = vadd.f32 0.0, %v1557
    %v1559 = vpop.f32.mrb[0].mxu0
    %v1560 = vpop.f32.mrb[0].mxu0
    %v1561 = vpop.f32.mrb[0].mxu0
    %1562 = vdwg.mxu0
    %v1563 = vadd.f32 %v426, %v1558
    %v1564 = vpack.c.bf16 %v1448, %v1448
    %1566 = vrot.lane.b32.xlu0 %v1564, 32
    %v1567 = vpop.permute.xlu0 %1566
    %v1569 = vsel %vm118, %v1567, 0
    %1571 = vmatprep.subr.bf16.mxu0 0
    %1572 = vmatpush1.bf16.msra.mxu0 %v438
    %1573 = vmatprep.subr.bf16.mxu0 0
    %1574 = vmatpush1.bf16.msra.mxu0 %v439
    %1575 = vmatprep.subr.bf16.mxu0 0
    %1576 = vmatpush1.bf16.msra.mxu0 0
    %1577 = vmatprep.subr.bf16.mxu0 0
    %1578 = vmatpush1.bf16.msra.mxu0 0
    %1579 = vmatprep.subr.bf16.mxu0 0
    %1580 = vmatpush1.bf16.msra.mxu0 0
    %1581 = vmatprep.subr.bf16.mxu0 0
    %1582 = vmatpush1.bf16.msra.mxu0 0
    %1583 = vmatprep.subr.bf16.mxu0 0
    %1584 = vmatpush1.bf16.msra.mxu0 0
    %1585 = vmatprep.subr.bf16.mxu0 0
    %1586 = vmatpush1.bf16.msra.mxu0 0
    %1587 = vmatprep.subr.bf16.mxu0 0
    %1588 = vmatpush1.bf16.msra.mxu0 0
    %1589 = vmatprep.subr.bf16.mxu0 0
    %1590 = vmatpush1.bf16.msra.mxu0 0
    %1591 = vmatprep.subr.bf16.mxu0 0
    %1592 = vmatpush1.bf16.msra.mxu0 0
    %1593 = vmatprep.subr.bf16.mxu0 0
    %1594 = vmatpush1.bf16.msra.mxu0 0
    %1595 = vmatprep.subr.bf16.mxu0 0
    %1596 = vmatpush1.bf16.msra.mxu0 0
    %1597 = vmatprep.subr.bf16.mxu0 0
    %1598 = vmatpush1.bf16.msra.mxu0 0
    %1599 = vmatprep.subr.bf16.mxu0 0
    %1600 = vmatpush1.bf16.msra.mxu0 0
    %1601 = vmatprep.subr.bf16.mxu0 0
    %1602 = vmatpush1.bf16.msra.mxu0 0
    %1603 = vmatprep.mubr.bf16.mxu0 0
    %1604 = vmatmul.mubr.bf16.gmra.mrb[0].mxu0 %v1569
    %v1605 = vpop.f32.mrb[0].mxu0
    %v1606 = vadd.f32 0.0, %v1605
    %v1607 = vpop.f32.mrb[0].mxu0
    %v1608 = vpop.f32.mrb[0].mxu0
    %v1609 = vpop.f32.mrb[0].mxu0
    %1610 = vdwg.mxu0
    %v1611 = vadd.f32 %v1563, %v1606
    %v1612 = vxor.u32 %v1611, 2147483648
    %v1613 = vmul.f32 %v1612, 1.442695
    %v1614 = vpow.pop %v1613
    %v1615 = vadd.f32 %v1614, 1.0
    %v1616 = vrcp.pop %v1615
    %v1617 = vmul.f32 1.0, %v1616
    %v1618 = vtanh.pop %v1611
    %v1619 = vmul.f32 %v1617, %v1442
    %1621 = vrot.lane.b32.xlu0 %v1618, 64
    %v1622 = vpop.permute.xlu0 %1621
    %v1624 = vmul.f32 %v1617, %v1622
    %1626 = vrot.lane.b32.xlu0 %v1624, 32
    %v1627 = vpop.permute.xlu0 %1626
    %v1629 = vadd.f32 %v1619, %v1627
    %v1630 = vtanh.pop %v1629
    %1632 = vrot.lane.b32.xlu0 %v1630, 64
    %v1633 = vpop.permute.xlu0 %1632
    %v1635 = vmul.f32 %v1617, %v1633
    %v1636 = vpack.c.bf16 %v1522, %v1522
    %1638 = vrot.lane.b32.xlu0 %v1636, 32
    %v1639 = vpop.permute.xlu0 %1638
    %v1641 = vsel %vm118, %v1639, 0
    %1643 = vmatprep.subr.bf16.mxu0 0
    %1644 = vmatpush1.bf16.msra.mxu0 %v378
    %1645 = vmatprep.subr.bf16.mxu0 0
    %1646 = vmatpush1.bf16.msra.mxu0 %v379
    %1647 = vmatprep.subr.bf16.mxu0 0
    %1648 = vmatpush1.bf16.msra.mxu0 0
    %1649 = vmatprep.subr.bf16.mxu0 0
    %1650 = vmatpush1.bf16.msra.mxu0 0
    %1651 = vmatprep.subr.bf16.mxu0 0
    %1652 = vmatpush1.bf16.msra.mxu0 0
    %1653 = vmatprep.subr.bf16.mxu0 0
    %1654 = vmatpush1.bf16.msra.mxu0 0
    %1655 = vmatprep.subr.bf16.mxu0 0
    %1656 = vmatpush1.bf16.msra.mxu0 0
    %1657 = vmatprep.subr.bf16.mxu0 0
    %1658 = vmatpush1.bf16.msra.mxu0 0
    %1659 = vmatprep.subr.bf16.mxu0 0
    %1660 = vmatpush1.bf16.msra.mxu0 0
    %1661 = vmatprep.subr.bf16.mxu0 0
    %1662 = vmatpush1.bf16.msra.mxu0 0
    %1663 = vmatprep.subr.bf16.mxu0 0
    %1664 = vmatpush1.bf16.msra.mxu0 0
    %1665 = vmatprep.subr.bf16.mxu0 0
    %1666 = vmatpush1.bf16.msra.mxu0 0
    %1667 = vmatprep.subr.bf16.mxu0 0
    %1668 = vmatpush1.bf16.msra.mxu0 0
    %1669 = vmatprep.subr.bf16.mxu0 0
    %1670 = vmatpush1.bf16.msra.mxu0 0
    %1671 = vmatprep.subr.bf16.mxu0 0
    %1672 = vmatpush1.bf16.msra.mxu0 0
    %1673 = vmatprep.subr.bf16.mxu0 0
    %1674 = vmatpush1.bf16.msra.mxu0 0
    %1675 = vmatprep.mubr.bf16.mxu0 0
    %1676 = vmatmul.mubr.bf16.gmra.mrb[0].mxu0 %v1641
    %v1677 = vpop.f32.mrb[0].mxu0
    %v1678 = vadd.f32 0.0, %v1677
    %v1679 = vpop.f32.mrb[0].mxu0
    %v1680 = vpop.f32.mrb[0].mxu0
    %v1681 = vpop.f32.mrb[0].mxu0
    %1682 = vdwg.mxu0
    %v1683 = vadd.f32 %v426, %v1678
    %v1684 = vpack.c.bf16 %v1635, %v1635
    %1686 = vrot.lane.b32.xlu0 %v1684, 32
    %v1687 = vpop.permute.xlu0 %1686
    %v1689 = vsel %vm118, %v1687, 0
    %1691 = vmatprep.subr.bf16.mxu0 0
    %1692 = vmatpush1.bf16.msra.mxu0 %v438
    %1693 = vmatprep.subr.bf16.mxu0 0
    %1694 = vmatpush1.bf16.msra.mxu0 %v439
    %1695 = vmatprep.subr.bf16.mxu0 0
    %1696 = vmatpush1.bf16.msra.mxu0 0
    %1697 = vmatprep.subr.bf16.mxu0 0
    %1698 = vmatpush1.bf16.msra.mxu0 0
    %1699 = vmatprep.subr.bf16.mxu0 0
    %1700 = vmatpush1.bf16.msra.mxu0 0
    %1701 = vmatprep.subr.bf16.mxu0 0
    %1702 = vmatpush1.bf16.msra.mxu0 0
    %1703 = vmatprep.subr.bf16.mxu0 0
    %1704 = vmatpush1.bf16.msra.mxu0 0
    %1705 = vmatprep.subr.bf16.mxu0 0
    %1706 = vmatpush1.bf16.msra.mxu0 0
    %1707 = vmatprep.subr.bf16.mxu0 0
    %1708 = vmatpush1.bf16.msra.mxu0 0
    %1709 = vmatprep.subr.bf16.mxu0 0
    %1710 = vmatpush1.bf16.msra.mxu0 0
    %1711 = vmatprep.subr.bf16.mxu0 0
    %1712 = vmatpush1.bf16.msra.mxu0 0
    %1713 = vmatprep.subr.bf16.mxu0 0
    %1714 = vmatpush1.bf16.msra.mxu0 0
    %1715 = vmatprep.subr.bf16.mxu0 0
    %1716 = vmatpush1.bf16.msra.mxu0 0
    %1717 = vmatprep.subr.bf16.mxu0 0
    %1718 = vmatpush1.bf16.msra.mxu0 0
    %1719 = vmatprep.subr.bf16.mxu0 0
    %1720 = vmatpush1.bf16.msra.mxu0 0
    %1721 = vmatprep.subr.bf16.mxu0 0
    %1722 = vmatpush1.bf16.msra.mxu0 0
    %1723 = vmatprep.mubr.bf16.mxu0 0
    %1724 = vmatmul.mubr.bf16.gmra.mrb[0].mxu0 %v1689
    %v1725 = vpop.f32.mrb[0].mxu0
    %v1726 = vadd.f32 0.0, %v1725
    %v1727 = vpop.f32.mrb[0].mxu0
    %v1728 = vpop.f32.mrb[0].mxu0
    %v1729 = vpop.f32.mrb[0].mxu0
    %1730 = vdwg.mxu0
    %v1731 = vadd.f32 %v1683, %v1726
    %v1732 = vxor.u32 %v1731, 2147483648
    %v1733 = vmul.f32 %v1732, 1.442695
    %v1734 = vpow.pop %v1733
    %v1735 = vadd.f32 %v1734, 1.0
    %v1736 = vrcp.pop %v1735
    %v1737 = vmul.f32 1.0, %v1736
    %v1738 = vtanh.pop %v1731
    %v1739 = vmul.f32 %v1737, %v1629
    %1741 = vrot.lane.b32.xlu0 %v1738, 64
    %v1742 = vpop.permute.xlu0 %1741
    %v1744 = vmul.f32 %v1737, %v1742
    %1746 = vrot.lane.b32.xlu0 %v1744, 32
    %v1747 = vpop.permute.xlu0 %1746
    %v1749 = vadd.f32 %v1739, %v1747
    %v1750 = vtanh.pop %v1749
    %1752 = vrot.lane.b32.xlu0 %v1750, 64
    %v1753 = vpop.permute.xlu0 %1752
    %v1755 = vmul.f32 %v1737, %v1753
    %1757 = vrot.lane.b32.xlu0 %v1522, 32
    %v1758 = vpop.permute.xlu0 %1757
    %1760 = vst.msk [vmem:[#allocation7] sm:$0xff] %vm118, %v1758
    %1762 = vrot.lane.b32.xlu0 %v1516, 96
    %v1763 = vpop.permute.xlu0 %1762
    %1765 = vst.msk [vmem:[#allocation8] sm:$0xff] %vm118, %v1763
    %1767 = vrot.lane.b32.xlu0 %v1755, 32
    %v1768 = vpop.permute.xlu0 %1767
    %s1770 = scalar_lea.vmem [#allocation7], 8
    %1771 = vst.msk [vmem:[%s1770] sm:$0xff] %vm118, %v1768
    %1773 = vrot.lane.b32.xlu0 %v1749, 96
    %v1774 = vpop.permute.xlu0 %1773
    %s1776 = scalar_lea.vmem [#allocation8], 8
    %1777 = vst.msk [vmem:[%s1776] sm:$0xff] %vm118, %v1774
    %v1778 = vld [vmem:[%s6] sm:$0xff]
    %v1779 = vld [vmem:[%s6 + $0x8] sm:$0xff]
    %v1780 = vld [vmem:[%s6 + $0x10] sm:$0xff]
    %v1781 = vld [vmem:[%s6 + $0x18] sm:$0xff]
    %v1782 = vld [vmem:[#allocation3] sm:$0x1]
    %v1784 = vlaneseq
    %v1785 = vshrl.u32 %v1784, 7
    %v1786 = vsub.s32 0, %v1785
    %v1787 = vrot.slane %v1782, %v1786
    %v1789 = vsel %vm118, %v1768, 0
    %1791 = vmatprep.subr.mxu0 0.0
    %1792 = vmatpush1.msra.mxu0 %v1778
    %1793 = vmatprep.subr.mxu0 0.0
    %1794 = vmatpush1.msra.mxu0 %v1779
    %1795 = vmatprep.subr.mxu0 0.0
    %1796 = vmatpush1.msra.mxu0 %v1780
    %1797 = vmatprep.subr.mxu0 0.0
    %1798 = vmatpush1.msra.mxu0 %v1781
    %1799 = vmatprep.subr.mxu0 0.0
    %1800 = vmatpush1.msra.mxu0 0.0
    %1801 = vmatprep.subr.mxu0 0.0
    %1802 = vmatpush1.msra.mxu0 0.0
    %1803 = vmatprep.subr.mxu0 0.0
    %1804 = vmatpush1.msra.mxu0 0.0
    %1805 = vmatprep.subr.mxu0 0.0
    %1806 = vmatpush1.msra.mxu0 0.0
    %1807 = vmatprep.subr.mxu0 0.0
    %1808 = vmatpush1.msra.mxu0 0.0
    %1809 = vmatprep.subr.mxu0 0.0
    %1810 = vmatpush1.msra.mxu0 0.0
    %1811 = vmatprep.subr.mxu0 0.0
    %1812 = vmatpush1.msra.mxu0 0.0
    %1813 = vmatprep.subr.mxu0 0.0
    %1814 = vmatpush1.msra.mxu0 0.0
    %1815 = vmatprep.subr.mxu0 0.0
    %1816 = vmatpush1.msra.mxu0 0.0
    %1817 = vmatprep.subr.mxu0 0.0
    %1818 = vmatpush1.msra.mxu0 0.0
    %1819 = vmatprep.subr.mxu0 0.0
    %1820 = vmatpush1.msra.mxu0 0.0
    %1821 = vmatprep.subr.mxu0 0.0
    %1822 = vmatpush1.msra.mxu0 0.0
    %1823 = vmatprep.subr.mxu0 0.0
    %1824 = vmatpush1.msra.mxu0 0.0
    %1825 = vmatprep.subr.mxu0 0.0
    %1826 = vmatpush1.msra.mxu0 0.0
    %1827 = vmatprep.subr.mxu0 0.0
    %1828 = vmatpush1.msra.mxu0 0.0
    %1829 = vmatprep.subr.mxu0 0.0
    %1830 = vmatpush1.msra.mxu0 0.0
    %1831 = vmatprep.subr.mxu0 0.0
    %1832 = vmatpush1.msra.mxu0 0.0
    %1833 = vmatprep.subr.mxu0 0.0
    %1834 = vmatpush1.msra.mxu0 0.0
    %1835 = vmatprep.subr.mxu0 0.0
    %1836 = vmatpush1.msra.mxu0 0.0
    %1837 = vmatprep.subr.mxu0 0.0
    %1838 = vmatpush1.msra.mxu0 0.0
    %1839 = vmatprep.subr.mxu0 0.0
    %1840 = vmatpush1.msra.mxu0 0.0
    %1841 = vmatprep.subr.mxu0 0.0
    %1842 = vmatpush1.msra.mxu0 0.0
    %1843 = vmatprep.subr.mxu0 0.0
    %1844 = vmatpush1.msra.mxu0 0.0
    %1845 = vmatprep.subr.mxu0 0.0
    %1846 = vmatpush1.msra.mxu0 0.0
    %1847 = vmatprep.subr.mxu0 0.0
    %1848 = vmatpush1.msra.mxu0 0.0
    %1849 = vmatprep.subr.mxu0 0.0
    %1850 = vmatpush1.msra.mxu0 0.0
    %1851 = vmatprep.subr.mxu0 0.0
    %1852 = vmatpush1.msra.mxu0 0.0
    %1853 = vmatprep.subr.mxu0 0.0
    %1854 = vmatpush1.msra.mxu0 0.0
    %1855 = vmatprep.mubr.f32.mxu0 0.0
    %1856 = vmatmul.mubr.f32.gmra.mrb[0].mxu0 %v1789
    %v1857 = vpop.f32.mrb[0].mxu0
    %v1858 = vadd.f32 %v1787, %v1857
    %v1859 = vpop.f32.mrb[0].mxu0
    %1860 = vdwg.mxu0
    %v1861 = vxor.u32 %v1858, 2147483648
    %v1862 = vmul.f32 %v1861, 1.442695
    %v1863 = vpow.pop %v1862
    %v1864 = vadd.f32 %v1863, 1.0
    %v1865 = vrcp.pop %v1864
    %v1866 = vmul.f32 1.0, %v1865
    %vm1867 = vcmask 7168
    %1868 = vst.msk [vmem:[%s8] sm:$0xff] %vm1867, %v1866
    // Predicated region
    $region38: #{tpu_custom_call.1} parent=1 // pred_check
      _
    $region39: #{tpu_custom_call.1} parent=1 // pred_check_branch
      %1870 = sbr.rel (0) target = $region41
    $region40: #{tpu_custom_call.1} parent=1 // pred_region
      _
    $region41: #{tpu_custom_call.1} parent=1 // pred_fallthru
      _
    // Predicated region
    $region42: #{tpu_custom_call.1} parent=1 // pred_check
      _
    $region43: #{tpu_custom_call.1} parent=1 // pred_check_branch
      %1872 = sbr.rel (0) target = $region45
    $region44: #{tpu_custom_call.1} parent=1 // pred_region
      %s1874 = ssub.s32 256, 256
      %1875 = vsyncadd [#allocation6], %s1874
      %s1876 = sshll.u32 [#allocation7], 4
      %s1877 = int_to_ptr.vmem [resolvable:$true] %s1876
      %1882 = dma.vmem_to_hbm [thread:$0]  %s1877, 256, %s9, [#allocation6], 128, 128, 8
    $region45: #{tpu_custom_call.1} parent=1 // pred_fallthru
      _
    // Predicated region
    $region46: #{tpu_custom_call.1} parent=1 // pred_check
      _
    $region47: #{tpu_custom_call.1} parent=1 // pred_check_branch
      %1884 = sbr.rel (0) target = $region49
    $region48: #{tpu_custom_call.1} parent=1 // pred_region
      %s1886 = ssub.s32 256, 256
      %1887 = vsyncadd [#allocation9], %s1886
      %s1888 = sshll.u32 [#allocation8], 4
      %s1889 = int_to_ptr.vmem [resolvable:$true] %s1888
      %1894 = dma.vmem_to_hbm [thread:$0]  %s1889, 256, %s10, [#allocation9], 128, 128, 8
    $region49: #{tpu_custom_call.1} parent=1 // pred_fallthru
      _
    // Predicated region
    $region50: #{tpu_custom_call.1} parent=1 // pred_check
      _
    $region51: #{tpu_custom_call.1} parent=1 // pred_check_branch
      %1896 = sbr.rel (0) target = $region53
    $region52: #{tpu_custom_call.1} parent=1 // pred_region
      _
    $region53: #{tpu_custom_call.1} parent=1 // pred_fallthru
      _
    // Predicated region
    $region54: #{tpu_custom_call.1} parent=1 // pred_check
      _
    $region55: #{tpu_custom_call.1} parent=1 // pred_check_branch
      %1898 = sbr.rel (0) target = $region57
    $region56: #{tpu_custom_call.1} parent=1 // pred_region
      %1899 = dma.done [#allocation6], 256
    $region57: #{tpu_custom_call.1} parent=1 // pred_fallthru
      _
    // Predicated region
    $region58: #{tpu_custom_call.1} parent=1 // pred_check
      _
    $region59: #{tpu_custom_call.1} parent=1 // pred_check_branch
      %1901 = sbr.rel (0) target = $region61
    $region60: #{tpu_custom_call.1} parent=1 // pred_region
      %1902 = dma.done [#allocation9], 256
    $region61: #{tpu_custom_call.1} parent=1 // pred_fallthru
      _
    %1903 = vsyncpa [#allocation5], 1
    %1904 = vsyncpa [#allocation6], 1
    %1905 = vsyncpa [#allocation9], 1

</llo_original>
